<compile_context>
chip_gen: v6e
topology: v6e:2x2x1
jax: 0.10.0
libtpu: 0.0.40
codegen_flags: <defaults>
</compile_context>

<pallas_src>
import jax
import jax.numpy as jnp
import numpy as np
from jax.experimental import pallas as pl
from jax.experimental.pallas import tpu as pltpu

BN_EPS = 1e-5


# ------------------------------ Pallas kernels ------------------------------

def _make_conv_kernel(H, W, C, apply_pre_act):
    """3x3 'same' conv for one sample as a single im2col MXU matmul.

    Inputs  : x (1, C, H*W) bf16  [pre-BN activation if apply_pre_act]
              edge_mask (2, H*W) bf16   row0: col>0, row1: col<W-1
              [scale, shift (C, 1) f32]  (only if apply_pre_act: BN+ReLU fused)
              w (Cout, 9*C) bf16         tap-major K
    Outputs : y (1, Cout, H*W), s/ss (1, Cout, 1) f32 channel sum / sum-of-sq
    Scratch : zp (C, H*W + 2*(W+1)) bf16 zero-padded flat slab
              patches (9*C, H*W) bf16    im2col matrix
    """
    HW = H * W
    PAD = W + 1  # enough flat padding to cover any (dy, dx) in {-1,0,1}^2

    def kernel(*refs):
        if apply_pre_act:
            (x_ref, mask_ref, scale_ref, shift_ref, w_ref,
             y_ref, s_ref, ss_ref, zp, patches) = refs
        else:
            (x_ref, mask_ref, w_ref,
             y_ref, s_ref, ss_ref, zp, patches) = refs

        x = x_ref[0]                                        # (C, HW) bf16
        if apply_pre_act:
            # fused BN (scale/shift from previous stage's batch stats) + ReLU,
            # done in f32 on the VPU, then back to bf16 for the MXU.
            xf = x.astype(jnp.float32) * scale_ref[...] + shift_ref[...]
            x = jnp.maximum(xf, 0.0).astype(jnp.bfloat16)

        # zero-padded flattened spatial slab: taps with row offsets dy=+-1 read
        # zeros automatically; column wrap of dx=+-1 is killed by edge masks.
        # Only the pad stripes need clearing — the interior is overwritten.
        zp[:, :PAD] = jnp.zeros((C, PAD), dtype=zp.dtype)
        zp[:, PAD + HW:] = jnp.zeros((C, PAD), dtype=zp.dtype)
        zp[:, PAD:PAD + HW] = x.astype(jnp.bfloat16)

        m_first = mask_ref[0:1, :]                          # 0.0 where col == 0
        m_last = mask_ref[1:2, :]                           # 0.0 where col == W-1

        # Build the (9*C, HW) im2col matrix once in VMEM (static lane slices,
        # no reshapes), then run ONE K=9*C matmul with a lane-dense output.
        t = 0
        for dy in (-1, 0, 1):
            for dx in (-1, 0, 1):
                start = PAD + dy * W + dx
                tap = zp[:, start:start + HW]               # (C, HW) bf16
                if dx == -1:
                    tap = tap * m_first
                elif dx == 1:
                    tap = tap * m_last
                patches[t * C:(t + 1) * C, :] = tap
                t += 1

        y = jnp.dot(w_ref[...], patches[...],
                    preferred_element_type=jnp.float32)     # (Cout, HW) f32

        # fused per-sample BN statistics (one-pass: sum and sum of squares),
        # taken from the f32 accumulator before the bf16 downcast.
        s_ref[0] = jnp.sum(y, axis=1, keepdims=True)
        ss_ref[0] = jnp.sum(y * y, axis=1, keepdims=True)
        y_ref[0] = y.astype(y_ref.dtype)

    return kernel


def _bn_relu_kernel(y_ref, scale_ref, shift_ref, o_ref):
    """Final BN (precomputed scale/shift) + ReLU, elementwise, lane-dense."""
    y = y_ref[0].astype(jnp.float32)
    o_ref[0] = jnp.maximum(y * scale_ref[...] + shift_ref[...], 0.0)


# ------------------------------ Pallas wrappers ------------------------------

def conv3x3_bn_stats(x_flat, w_flat, edge_mask, H, W, *, out_dtype,
                     scale=None, shift=None):
    """Per-sample 3x3 conv (+ optional fused pre-BN+ReLU) + channel statistics."""
    N, C, HW = x_flat.shape
    Cout = w_flat.shape[0]
    apply_pre = scale is not None
    kernel = _make_conv_kernel(H, W, C, apply_pre)

    in_specs = [pl.BlockSpec((1, C, HW), lambda n: (n, 0, 0)),
                pl.BlockSpec((2, HW), lambda n: (0, 0))]
    args = [x_flat, edge_mask]
    if apply_pre:
        in_specs += [pl.BlockSpec((C, 1), lambda n: (0, 0)),
                     pl.BlockSpec((C, 1), lambda n: (0, 0))]
        args += [scale, shift]
    in_specs.append(pl.BlockSpec((Cout, 9 * C), lambda n: (0, 0)))
    args.append(w_flat)

    return pl.pallas_call(
        kernel,
        out_shape=(jax.ShapeDtypeStruct((N, Cout, HW), out_dtype),
                   jax.ShapeDtypeStruct((N, Cout, 1), jnp.float32),
                   jax.ShapeDtypeStruct((N, Cout, 1), jnp.float32)),
        grid=(N,),
        in_specs=in_specs,
        out_specs=(pl.BlockSpec((1, Cout, HW), lambda n: (n, 0, 0)),
                   pl.BlockSpec((1, Cout, 1), lambda n: (n, 0, 0)),
                   pl.BlockSpec((1, Cout, 1), lambda n: (n, 0, 0))),
        scratch_shapes=[pltpu.VMEM((C, HW + 2 * (W + 1)), jnp.bfloat16),
                        pltpu.VMEM((9 * C, HW), jnp.bfloat16)],
        compiler_params=pltpu.CompilerParams(dimension_semantics=("parallel",)),
    )(*args)


def bn_relu_apply(y, scale, shift):
    N, C, HW = y.shape
    return pl.pallas_call(
        _bn_relu_kernel,
        out_shape=jax.ShapeDtypeStruct((N, C, HW), jnp.float32),
        grid=(N,),
        in_specs=[pl.BlockSpec((1, C, HW), lambda n: (n, 0, 0)),
                  pl.BlockSpec((C, 1), lambda n: (0, 0)),
                  pl.BlockSpec((C, 1), lambda n: (0, 0))],
        out_specs=pl.BlockSpec((1, C, HW), lambda n: (n, 0, 0)),
        compiler_params=pltpu.CompilerParams(dimension_semantics=("parallel",)),
    )(y, scale, shift)


def _bn_scale_shift(s, ss, gamma, beta, count):
    """Turn per-sample channel sum / sumsq into BN scale & shift (f32)."""
    total = jnp.sum(s, axis=0)[:, 0]
    total_sq = jnp.sum(ss, axis=0)[:, 0]
    mean = total / count
    var = jnp.maximum(total_sq / count - mean * mean, 0.0)   # one-pass, f32
    scale = gamma * jax.lax.rsqrt(var + BN_EPS)
    shift = beta - mean * scale
    return (scale.astype(jnp.float32).reshape(-1, 1),
            shift.astype(jnp.float32).reshape(-1, 1))


# ------------------------------ JAX glue ------------------------------------

def upsample2x_bilinear_nchw(x):
    """nn.Upsample(scale_factor=2, mode='bilinear', align_corners=True), NCHW."""
    N, C, H, W = x.shape
    Ho, Wo = 2 * H, 2 * W

    def coords(n_in, n_out):
        if n_in == 1:
            z = jnp.zeros((n_out,), jnp.int32)
            return z, z, jnp.zeros((n_out,), jnp.float32)
        pos = jnp.arange(n_out, dtype=jnp.float32) * ((n_in - 1) / (n_out - 1))
        lo = jnp.floor(pos).astype(jnp.int32)
        hi = jnp.minimum(lo + 1, n_in - 1)
        return lo, hi, pos - lo.astype(jnp.float32)

    y0, y1, fy = coords(H, Ho)
    x0, x1, fx = coords(W, Wo)
    top = x[:, :, y0, :]
    bot = x[:, :, y1, :]
    rows = top * (1.0 - fy)[None, None, :, None] + bot * fy[None, None, :, None]
    left = rows[:, :, :, x0]
    right = rows[:, :, :, x1]
    return left * (1.0 - fx)[None, None, None, :] + right * fx[None, None, None, :]


def init_params(in_ch, out_ch, key):
    mid_ch = in_ch // 2  # DoubleConv(in_ch, out_ch, in_ch // 2) for bilinear=True
    k1, k2, k3, k4, k5, k6 = jax.random.split(key, 6)
    return {
        "w1": 0.1 * jax.random.normal(k1, (3, 3, in_ch, mid_ch), jnp.float32),
        "g1": 1.0 + 0.1 * jax.random.normal(k2, (mid_ch,), jnp.float32),
        "b1": 0.1 * jax.random.normal(k3, (mid_ch,), jnp.float32),
        "w2": 0.1 * jax.random.normal(k4, (3, 3, mid_ch, out_ch), jnp.float32),
        "g2": 1.0 + 0.1 * jax.random.normal(k5, (out_ch,), jnp.float32),
        "b2": 0.1 * jax.random.normal(k6, (out_ch,), jnp.float32),
    }


def up_forward(params, x1_nchw, x2_nchw):
    """Up.forward(x1, x2): bilinear 2x upsample -> pad -> concat -> DoubleConv."""
    x1 = x1_nchw.astype(jnp.float32)
    x2 = x2_nchw.astype(jnp.float32)
    N, _, H, W = x2.shape
    HW = H * W

    # TODO(synk): upsample + F.pad + channel concat kept as XLA glue (the
    # gather-style bilinear indexing has no clean BlockSpec form); could be
    # folded into the first conv's input DMA for large feature maps.
    x1 = upsample2x_bilinear_nchw(x1)
    dY = H - x1.shape[2]
    dX = W - x1.shape[3]
    x1 = jnp.pad(x1, ((0, 0), (0, 0),
                      (dY // 2, dY - dY // 2),
                      (dX // 2, dX - dX // 2)))
    x = jnp.concatenate([x2, x1], axis=1)                    # (N, in_ch, H, W)
    x_flat = x.reshape(N, -1, HW).astype(jnp.bfloat16)       # bf16 at boundary

    # weights HWIO (3,3,Cin,Cout) -> (Cout, 9*Cin), tap-major K, bf16
    w1 = params["w1"]; Cin, Cmid = w1.shape[2], w1.shape[3]
    w2 = params["w2"]; Cout = w2.shape[3]
    w1f = jnp.transpose(w1.reshape(9 * Cin, Cmid)).astype(jnp.bfloat16)
    w2f = jnp.transpose(w2.reshape(9 * Cmid, Cout)).astype(jnp.bfloat16)

    # column-edge masks: 1.0 inside, 0.0 where a dx=+-1 tap would wrap rows
    col = np.arange(HW, dtype=np.int64) % W
    edge_mask = jnp.asarray(np.stack([col > 0, col < (W - 1)])
                            .astype(np.float32)).astype(jnp.bfloat16)

    count = float(N * HW)

    # conv1 (+ fused BN1 statistics), bf16 intermediate
    y1, s1, ss1 = conv3x3_bn_stats(x_flat, w1f, edge_mask, H, W,
                                   out_dtype=jnp.bfloat16)
    sc1, sh1 = _bn_scale_shift(s1, ss1, params["g1"], params["b1"], count)

    # BN1+ReLU fused into conv2 (+ fused BN2 statistics), bf16 intermediate
    y2, s2, ss2 = conv3x3_bn_stats(y1, w2f, edge_mask, H, W,
                                   out_dtype=jnp.bfloat16,
                                   scale=sc1, shift=sh1)
    sc2, sh2 = _bn_scale_shift(s2, ss2, params["g2"], params["b2"], count)

    out = bn_relu_apply(y2, sc2, sh2)                        # (N, Cout, HW) f32
    return out.reshape(N, Cout, H, W)                        # NCHW


# ------------------------------ pure-JAX reference ---------------------------

def _conv_ref(x_nchw, w_hwio):
    return jax.lax.conv_general_dilated(
        x_nchw, w_hwio, window_strides=(1, 1), padding="SAME",
        dimension_numbers=("NCHW", "HWIO", "NCHW"))


def _bn_relu_ref(x, g, b):
    m = jnp.mean(x, axis=(0, 2, 3), keepdims=True)
    v = jnp.mean((x - m) ** 2, axis=(0, 2, 3), keepdims=True)
    y = (x - m) * jax.lax.rsqrt(v + BN_EPS) * g.reshape(1, -1, 1, 1) \
        + b.reshape(1, -1, 1, 1)
    return jnp.maximum(y, 0.0)


def up_forward_ref(params, x1_nchw, x2_nchw):
    x1 = upsample2x_bilinear_nchw(x1_nchw.astype(jnp.float32))
    x2 = x2_nchw.astype(jnp.float32)
    dY = x2.shape[2] - x1.shape[2]
    dX = x2.shape[3] - x1.shape[3]
    x1 = jnp.pad(x1, ((0, 0), (0, 0),
                      (dY // 2, dY - dY // 2), (dX // 2, dX - dX // 2)))
    x = jnp.concatenate([x2, x1], axis=1)
    h = _bn_relu_ref(_conv_ref(x, params["w1"]), params["g1"], params["b1"])
    h = _bn_relu_ref(_conv_ref(h, params["w2"]), params["g2"], params["b2"])
    return h


# ----------------------------------- main ------------------------------------

if __name__ == "__main__":
    in_ch, out_ch = 8, 4          # Up(in_ch=8, out_ch=4, bilinear=True)
    N, H2, W2 = 2, 16, 16

    key = jax.random.PRNGKey(0)
    kx1, kx2, kp = jax.random.split(key, 3)
    # x1: deeper feature map (in_ch // 2 channels, half spatial size)
    # x2: skip connection   (in_ch // 2 channels, full spatial size)
    x1 = jax.random.normal(kx1, (N, in_ch // 2, H2 // 2, W2 // 2), jnp.float32)
    x2 = jax.random.normal(kx2, (N, in_ch // 2, H2, W2), jnp.float32)
    params = init_params(in_ch, out_ch, kp)

    up_jit = jax.jit(up_forward)
    out = jax.block_until_ready(up_jit(params, x1, x2))
    assert out.shape == (N, out_ch, H2, W2), out.shape

    # bf16 matmul + bf16 intermediates vs. f32 reference -> loose tolerance.
    ref = jax.block_until_ready(up_forward_ref(params, x1, x2))
    np.testing.assert_allclose(np.asarray(out), np.asarray(ref),
                               rtol=5e-2, atol=5e-2)

    print("KERNEL_OK")
</pallas_src>

<mosaic_0001>
module attributes {stable_mosaic.version = 11 : i64} {
  func.func @kernel(%arg0: i32, %arg1: memref<1x8x256xbf16, #tpu.memory_space<vmem>>, %arg2: memref<2x256xbf16, #tpu.memory_space<vmem>>, %arg3: memref<4x72xbf16, #tpu.memory_space<vmem>>, %arg4: memref<1x4x256xbf16, #tpu.memory_space<vmem>>, %arg5: memref<1x4x1xf32, #tpu.memory_space<vmem>>, %arg6: memref<1x4x1xf32, #tpu.memory_space<vmem>>, %arg7: memref<8x290xbf16, #tpu.memory_space<vmem>>, %arg8: memref<72x256xbf16, #tpu.memory_space<vmem>>) attributes {dimension_semantics = [#tpu.dimension_semantics<parallel>], iteration_bounds = array<i64: 2>, scalar_prefetch = 0 : i64, scratch_operands = 2 : i64, tpu.core_type = #tpu.core_type<tc>, window_params = [{transform_indices = @transform_0, window_bounds = array<i64: 1, 8, 256>}, {pipeline_mode = #tpu.pipeline_mode<synchronous>, transform_indices = @transform_1, window_bounds = array<i64: 2, 256>}, {pipeline_mode = #tpu.pipeline_mode<synchronous>, transform_indices = @transform_2, window_bounds = array<i64: 4, 72>}, {transform_indices = @transform_3, window_bounds = array<i64: 1, 4, 256>}, {transform_indices = @transform_4, window_bounds = array<i64: 1, 4, 1>}, {transform_indices = @transform_5, window_bounds = array<i64: 1, 4, 1>}]} {
    %c0 = arith.constant 0 : index
    %c0_0 = arith.constant 0 : index
    %c0_1 = arith.constant 0 : index
    %0 = vector.load %arg1[%c0, %c0_0, %c0_1] : memref<1x8x256xbf16, #tpu.memory_space<vmem>>, vector<1x8x256xbf16>
    %1 = vector.shape_cast %0 : vector<1x8x256xbf16> to vector<8x256xbf16>
    %cst = arith.constant 0.000000e+00 : bf16
    %2 = vector.broadcast %cst : bf16 to vector<8x17xbf16>
    %c0_2 = arith.constant 0 : index
    %c0_3 = arith.constant 0 : index
    %3 = vector.load %arg7[%c0_2, %c0_3] : memref<8x290xbf16, #tpu.memory_space<vmem>>, vector<8x17xbf16>
    tpu.vector_store %arg7[%c0_2, %c0_3], %2 {strides = array<i32>} : memref<8x290xbf16, #tpu.memory_space<vmem>>, vector<8x17xbf16>,
    %cst_4 = arith.constant 0.000000e+00 : bf16
    %4 = vector.broadcast %cst_4 : bf16 to vector<8x17xbf16>
    %c0_5 = arith.constant 0 : index
    %c273 = arith.constant 273 : index
    %5 = vector.load %arg7[%c0_5, %c273] : memref<8x290xbf16, #tpu.memory_space<vmem>>, vector<8x17xbf16>
    tpu.vector_store %arg7[%c0_5, %c273], %4 {strides = array<i32>} : memref<8x290xbf16, #tpu.memory_space<vmem>>, vector<8x17xbf16>,
    %c0_6 = arith.constant 0 : index
    %c17 = arith.constant 17 : index
    %6 = vector.load %arg7[%c0_6, %c17] : memref<8x290xbf16, #tpu.memory_space<vmem>>, vector<8x256xbf16>
    tpu.vector_store %arg7[%c0_6, %c17], %1 {strides = array<i32>} : memref<8x290xbf16, #tpu.memory_space<vmem>>, vector<8x256xbf16>,
    %c0_7 = arith.constant 0 : index
    %c0_8 = arith.constant 0 : index
    %7 = vector.load %arg2[%c0_7, %c0_8] : memref<2x256xbf16, #tpu.memory_space<vmem>>, vector<1x256xbf16>
    %c1 = arith.constant 1 : index
    %c0_9 = arith.constant 0 : index
    %8 = vector.load %arg2[%c1, %c0_9] : memref<2x256xbf16, #tpu.memory_space<vmem>>, vector<1x256xbf16>
    %c0_10 = arith.constant 0 : index
    %c0_11 = arith.constant 0 : index
    %9 = vector.load %arg7[%c0_10, %c0_11] : memref<8x290xbf16, #tpu.memory_space<vmem>>, vector<8x256xbf16>
    %10 = vector.broadcast %7 : vector<1x256xbf16> to vector<8x256xbf16>
    %11 = arith.mulf %9, %10 : vector<8x256xbf16>
    %c0_12 = arith.constant 0 : index
    %c0_13 = arith.constant 0 : index
    %12 = vector.load %arg8[%c0_12, %c0_13] : memref<72x256xbf16, #tpu.memory_space<vmem>>, vector<8x256xbf16>
    tpu.vector_store %arg8[%c0_12, %c0_13], %11 {strides = array<i32>} : memref<72x256xbf16, #tpu.memory_space<vmem>>, vector<8x256xbf16>,
    %c0_14 = arith.constant 0 : index
    %c1_15 = arith.constant 1 : index
    %13 = vector.load %arg7[%c0_14, %c1_15] : memref<8x290xbf16, #tpu.memory_space<vmem>>, vector<8x256xbf16>
    %c8 = arith.constant 8 : index
    %c0_16 = arith.constant 0 : index
    %14 = vector.load %arg8[%c8, %c0_16] : memref<72x256xbf16, #tpu.memory_space<vmem>>, vector<8x256xbf16>
    tpu.vector_store %arg8[%c8, %c0_16], %13 {strides = array<i32>} : memref<72x256xbf16, #tpu.memory_space<vmem>>, vector<8x256xbf16>,
    %c0_17 = arith.constant 0 : index
    %c2 = arith.constant 2 : index
    %15 = vector.load %arg7[%c0_17, %c2] : memref<8x290xbf16, #tpu.memory_space<vmem>>, vector<8x256xbf16>
    %16 = vector.broadcast %8 : vector<1x256xbf16> to vector<8x256xbf16>
    %17 = arith.mulf %15, %16 : vector<8x256xbf16>
    %c16 = arith.constant 16 : index
    %c0_18 = arith.constant 0 : index
    %18 = vector.load %arg8[%c16, %c0_18] : memref<72x256xbf16, #tpu.memory_space<vmem>>, vector<8x256xbf16>
    tpu.vector_store %arg8[%c16, %c0_18], %17 {strides = array<i32>} : memref<72x256xbf16, #tpu.memory_space<vmem>>, vector<8x256xbf16>,
    %c0_19 = arith.constant 0 : index
    %c16_20 = arith.constant 16 : index
    %19 = vector.load %arg7[%c0_19, %c16_20] : memref<8x290xbf16, #tpu.memory_space<vmem>>, vector<8x256xbf16>
    %20 = vector.broadcast %7 : vector<1x256xbf16> to vector<8x256xbf16>
    %21 = arith.mulf %19, %20 : vector<8x256xbf16>
    %c24 = arith.constant 24 : index
    %c0_21 = arith.constant 0 : index
    %22 = vector.load %arg8[%c24, %c0_21] : memref<72x256xbf16, #tpu.memory_space<vmem>>, vector<8x256xbf16>
    tpu.vector_store %arg8[%c24, %c0_21], %21 {strides = array<i32>} : memref<72x256xbf16, #tpu.memory_space<vmem>>, vector<8x256xbf16>,
    %c0_22 = arith.constant 0 : index
    %c17_23 = arith.constant 17 : index
    %23 = vector.load %arg7[%c0_22, %c17_23] : memref<8x290xbf16, #tpu.memory_space<vmem>>, vector<8x256xbf16>
    %c32 = arith.constant 32 : index
    %c0_24 = arith.constant 0 : index
    %24 = vector.load %arg8[%c32, %c0_24] : memref<72x256xbf16, #tpu.memory_space<vmem>>, vector<8x256xbf16>
    tpu.vector_store %arg8[%c32, %c0_24], %23 {strides = array<i32>} : memref<72x256xbf16, #tpu.memory_space<vmem>>, vector<8x256xbf16>,
    %c0_25 = arith.constant 0 : index
    %c18 = arith.constant 18 : index
    %25 = vector.load %arg7[%c0_25, %c18] : memref<8x290xbf16, #tpu.memory_space<vmem>>, vector<8x256xbf16>
    %26 = vector.broadcast %8 : vector<1x256xbf16> to vector<8x256xbf16>
    %27 = arith.mulf %25, %26 : vector<8x256xbf16>
    %c40 = arith.constant 40 : index
    %c0_26 = arith.constant 0 : index
    %28 = vector.load %arg8[%c40, %c0_26] : memref<72x256xbf16, #tpu.memory_space<vmem>>, vector<8x256xbf16>
    tpu.vector_store %arg8[%c40, %c0_26], %27 {strides = array<i32>} : memref<72x256xbf16, #tpu.memory_space<vmem>>, vector<8x256xbf16>,
    %c0_27 = arith.constant 0 : index
    %c32_28 = arith.constant 32 : index
    %29 = vector.load %arg7[%c0_27, %c32_28] : memref<8x290xbf16, #tpu.memory_space<vmem>>, vector<8x256xbf16>
    %30 = vector.broadcast %7 : vector<1x256xbf16> to vector<8x256xbf16>
    %31 = arith.mulf %29, %30 : vector<8x256xbf16>
    %c48 = arith.constant 48 : index
    %c0_29 = arith.constant 0 : index
    %32 = vector.load %arg8[%c48, %c0_29] : memref<72x256xbf16, #tpu.memory_space<vmem>>, vector<8x256xbf16>
    tpu.vector_store %arg8[%c48, %c0_29], %31 {strides = array<i32>} : memref<72x256xbf16, #tpu.memory_space<vmem>>, vector<8x256xbf16>,
    %c0_30 = arith.constant 0 : index
    %c33 = arith.constant 33 : index
    %33 = vector.load %arg7[%c0_30, %c33] : memref<8x290xbf16, #tpu.memory_space<vmem>>, vector<8x256xbf16>
    %c56 = arith.constant 56 : index
    %c0_31 = arith.constant 0 : index
    %34 = vector.load %arg8[%c56, %c0_31] : memref<72x256xbf16, #tpu.memory_space<vmem>>, vector<8x256xbf16>
    tpu.vector_store %arg8[%c56, %c0_31], %33 {strides = array<i32>} : memref<72x256xbf16, #tpu.memory_space<vmem>>, vector<8x256xbf16>,
    %c0_32 = arith.constant 0 : index
    %c34 = arith.constant 34 : index
    %35 = vector.load %arg7[%c0_32, %c34] : memref<8x290xbf16, #tpu.memory_space<vmem>>, vector<8x256xbf16>
    %36 = vector.broadcast %8 : vector<1x256xbf16> to vector<8x256xbf16>
    %37 = arith.mulf %35, %36 : vector<8x256xbf16>
    %c64 = arith.constant 64 : index
    %c0_33 = arith.constant 0 : index
    %38 = vector.load %arg8[%c64, %c0_33] : memref<72x256xbf16, #tpu.memory_space<vmem>>, vector<8x256xbf16>
    tpu.vector_store %arg8[%c64, %c0_33], %37 {strides = array<i32>} : memref<72x256xbf16, #tpu.memory_space<vmem>>, vector<8x256xbf16>,
    %c0_34 = arith.constant 0 : index
    %c0_35 = arith.constant 0 : index
    %39 = vector.load %arg3[%c0_34, %c0_35] : memref<4x72xbf16, #tpu.memory_space<vmem>>, vector<4x72xbf16>
    %c0_36 = arith.constant 0 : index
    %c0_37 = arith.constant 0 : index
    %40 = vector.load %arg8[%c0_36, %c0_37] : memref<72x256xbf16, #tpu.memory_space<vmem>>, vector<72x256xbf16>
    %cst_38 = arith.constant dense<0.000000e+00> : vector<4x256xf32>
    %41 = tpu.matmul %39, %40, %cst_38 {dimension_numbers = #tpu.dot_dimension_numbers<[1], [0], [0], [1], [0, 0, 1, 1], [], []>} : vector<4x72xbf16>, vector<72x256xbf16>, vector<4x256xf32> -> vector<4x256xf32>
    %cst_39 = arith.constant dense<0.000000e+00> : vector<4xf32>
    %42 = vector.multi_reduction <add>, %41, %cst_39 [1] : vector<4x256xf32> to vector<4xf32>
    %43 = vector.shape_cast %42 : vector<4xf32> to vector<4x1xf32>
    %c0_40 = arith.constant 0 : index
    %c0_41 = arith.constant 0 : index
    %c0_42 = arith.constant 0 : index
    %44 = vector.load %arg5[%c0_40, %c0_41, %c0_42] : memref<1x4x1xf32, #tpu.memory_space<vmem>>, vector<1x4x1xf32>
    %45 = vector.shape_cast %44 : vector<1x4x1xf32> to vector<4x1xf32>
    %46 = vector.shape_cast %43 : vector<4x1xf32> to vector<1x4x1xf32>
    tpu.vector_store %arg5[%c0_40, %c0_41, %c0_42], %46 {strides = array<i32>} : memref<1x4x1xf32, #tpu.memory_space<vmem>>, vector<1x4x1xf32>,
    %47 = arith.mulf %41, %41 : vector<4x256xf32>
    %cst_43 = arith.constant dense<0.000000e+00> : vector<4xf32>
    %48 = vector.multi_reduction <add>, %47, %cst_43 [1] : vector<4x256xf32> to vector<4xf32>
    %49 = vector.shape_cast %48 : vector<4xf32> to vector<4x1xf32>
    %c0_44 = arith.constant 0 : index
    %c0_45 = arith.constant 0 : index
    %c0_46 = arith.constant 0 : index
    %50 = vector.load %arg6[%c0_44, %c0_45, %c0_46] : memref<1x4x1xf32, #tpu.memory_space<vmem>>, vector<1x4x1xf32>
    %51 = vector.shape_cast %50 : vector<1x4x1xf32> to vector<4x1xf32>
    %52 = vector.shape_cast %49 : vector<4x1xf32> to vector<1x4x1xf32>
    tpu.vector_store %arg6[%c0_44, %c0_45, %c0_46], %52 {strides = array<i32>} : memref<1x4x1xf32, #tpu.memory_space<vmem>>, vector<1x4x1xf32>,
    %53 = arith.truncf %41 : vector<4x256xf32> to vector<4x256xbf16>
    %c0_47 = arith.constant 0 : index
    %c0_48 = arith.constant 0 : index
    %c0_49 = arith.constant 0 : index
    %54 = vector.load %arg4[%c0_47, %c0_48, %c0_49] : memref<1x4x256xbf16, #tpu.memory_space<vmem>>, vector<1x4x256xbf16>
    %55 = vector.shape_cast %54 : vector<1x4x256xbf16> to vector<4x256xbf16>
    %56 = vector.shape_cast %53 : vector<4x256xbf16> to vector<1x4x256xbf16>
    tpu.vector_store %arg4[%c0_47, %c0_48, %c0_49], %56 {strides = array<i32>} : memref<1x4x256xbf16, #tpu.memory_space<vmem>>, vector<1x4x256xbf16>,
    return
  }
  func.func @transform_0(%arg0: i32) -> (i32, i32, i32) {
    %c0_i32 = arith.constant 0 : i32
    %c0_i32_0 = arith.constant 0 : i32
    %c0_i32_1 = arith.constant 0 : i32
    return %arg0, %c0_i32, %c0_i32_0 : i32, i32, i32
  }
  func.func @transform_1(%arg0: i32) -> (i32, i32) {
    %c0_i32 = arith.constant 0 : i32
    %c0_i32_0 = arith.constant 0 : i32
    %c0_i32_1 = arith.constant 0 : i32
    return %c0_i32, %c0_i32_0 : i32, i32
  }
  func.func @transform_2(%arg0: i32) -> (i32, i32) {
    %c0_i32 = arith.constant 0 : i32
    %c0_i32_0 = arith.constant 0 : i32
    %c0_i32_1 = arith.constant 0 : i32
    return %c0_i32, %c0_i32_0 : i32, i32
  }
  func.func @transform_3(%arg0: i32) -> (i32, i32, i32) {
    %c0_i32 = arith.constant 0 : i32
    %c0_i32_0 = arith.constant 0 : i32
    %c0_i32_1 = arith.constant 0 : i32
    return %arg0, %c0_i32, %c0_i32_0 : i32, i32, i32
  }
  func.func @transform_4(%arg0: i32) -> (i32, i32, i32) {
    %c0_i32 = arith.constant 0 : i32
    %c0_i32_0 = arith.constant 0 : i32
    %c0_i32_1 = arith.constant 0 : i32
    return %arg0, %c0_i32, %c0_i32_0 : i32, i32, i32
  }
  func.func @transform_5(%arg0: i32) -> (i32, i32, i32) {
    %c0_i32 = arith.constant 0 : i32
    %c0_i32_0 = arith.constant 0 : i32
    %c0_i32_1 = arith.constant 0 : i32
    return %arg0, %c0_i32, %c0_i32_0 : i32, i32, i32
  }
}

module attributes {stable_mosaic.version = 11 : i64} {
  func.func @kernel(%arg0: i32, %arg1: memref<1x4x256xbf16, #tpu.memory_space<vmem>>, %arg2: memref<2x256xbf16, #tpu.memory_space<vmem>>, %arg3: memref<4x1xf32, #tpu.memory_space<vmem>>, %arg4: memref<4x1xf32, #tpu.memory_space<vmem>>, %arg5: memref<4x36xbf16, #tpu.memory_space<vmem>>, %arg6: memref<1x4x256xbf16, #tpu.memory_space<vmem>>, %arg7: memref<1x4x1xf32, #tpu.memory_space<vmem>>, %arg8: memref<1x4x1xf32, #tpu.memory_space<vmem>>, %arg9: memref<4x290xbf16, #tpu.memory_space<vmem>>, %arg10: memref<36x256xbf16, #tpu.memory_space<vmem>>) attributes {dimension_semantics = [#tpu.dimension_semantics<parallel>], iteration_bounds = array<i64: 2>, scalar_prefetch = 0 : i64, scratch_operands = 2 : i64, tpu.core_type = #tpu.core_type<tc>, window_params = [{transform_indices = @transform_0, window_bounds = array<i64: 1, 4, 256>}, {pipeline_mode = #tpu.pipeline_mode<synchronous>, transform_indices = @transform_1, window_bounds = array<i64: 2, 256>}, {pipeline_mode = #tpu.pipeline_mode<synchronous>, transform_indices = @transform_2, window_bounds = array<i64: 4, 1>}, {pipeline_mode = #tpu.pipeline_mode<synchronous>, transform_indices = @transform_3, window_bounds = array<i64: 4, 1>}, {pipeline_mode = #tpu.pipeline_mode<synchronous>, transform_indices = @transform_4, window_bounds = array<i64: 4, 36>}, {transform_indices = @transform_5, window_bounds = array<i64: 1, 4, 256>}, {transform_indices = @transform_6, window_bounds = array<i64: 1, 4, 1>}, {transform_indices = @transform_7, window_bounds = array<i64: 1, 4, 1>}]} {
    %c0 = arith.constant 0 : index
    %c0_0 = arith.constant 0 : index
    %c0_1 = arith.constant 0 : index
    %0 = vector.load %arg1[%c0, %c0_0, %c0_1] : memref<1x4x256xbf16, #tpu.memory_space<vmem>>, vector<1x4x256xbf16>
    %1 = vector.shape_cast %0 : vector<1x4x256xbf16> to vector<4x256xbf16>
    %2 = arith.extf %1 : vector<4x256xbf16> to vector<4x256xf32>
    %c0_2 = arith.constant 0 : index
    %c0_3 = arith.constant 0 : index
    %3 = vector.load %arg3[%c0_2, %c0_3] : memref<4x1xf32, #tpu.memory_space<vmem>>, vector<4x1xf32>
    %4 = vector.broadcast %3 : vector<4x1xf32> to vector<4x256xf32>
    %5 = arith.mulf %2, %4 : vector<4x256xf32>
    %c0_4 = arith.constant 0 : index
    %c0_5 = arith.constant 0 : index
    %6 = vector.load %arg4[%c0_4, %c0_5] : memref<4x1xf32, #tpu.memory_space<vmem>>, vector<4x1xf32>
    %7 = vector.broadcast %6 : vector<4x1xf32> to vector<4x256xf32>
    %8 = arith.addf %5, %7 : vector<4x256xf32>
    %cst = arith.constant 0.000000e+00 : f32
    %9 = vector.broadcast %cst : f32 to vector<4x256xf32>
    %10 = arith.maximumf %8, %9 : vector<4x256xf32>
    %11 = arith.truncf %10 : vector<4x256xf32> to vector<4x256xbf16>
    %cst_6 = arith.constant 0.000000e+00 : bf16
    %12 = vector.broadcast %cst_6 : bf16 to vector<4x17xbf16>
    %c0_7 = arith.constant 0 : index
    %c0_8 = arith.constant 0 : index
    %13 = vector.load %arg9[%c0_7, %c0_8] : memref<4x290xbf16, #tpu.memory_space<vmem>>, vector<4x17xbf16>
    tpu.vector_store %arg9[%c0_7, %c0_8], %12 {strides = array<i32>} : memref<4x290xbf16, #tpu.memory_space<vmem>>, vector<4x17xbf16>,
    %cst_9 = arith.constant 0.000000e+00 : bf16
    %14 = vector.broadcast %cst_9 : bf16 to vector<4x17xbf16>
    %c0_10 = arith.constant 0 : index
    %c273 = arith.constant 273 : index
    %15 = vector.load %arg9[%c0_10, %c273] : memref<4x290xbf16, #tpu.memory_space<vmem>>, vector<4x17xbf16>
    tpu.vector_store %arg9[%c0_10, %c273], %14 {strides = array<i32>} : memref<4x290xbf16, #tpu.memory_space<vmem>>, vector<4x17xbf16>,
    %c0_11 = arith.constant 0 : index
    %c17 = arith.constant 17 : index
    %16 = vector.load %arg9[%c0_11, %c17] : memref<4x290xbf16, #tpu.memory_space<vmem>>, vector<4x256xbf16>
    tpu.vector_store %arg9[%c0_11, %c17], %11 {strides = array<i32>} : memref<4x290xbf16, #tpu.memory_space<vmem>>, vector<4x256xbf16>,
    %c0_12 = arith.constant 0 : index
    %c0_13 = arith.constant 0 : index
    %17 = vector.load %arg2[%c0_12, %c0_13] : memref<2x256xbf16, #tpu.memory_space<vmem>>, vector<1x256xbf16>
    %c1 = arith.constant 1 : index
    %c0_14 = arith.constant 0 : index
    %18 = vector.load %arg2[%c1, %c0_14] : memref<2x256xbf16, #tpu.memory_space<vmem>>, vector<1x256xbf16>
    %c0_15 = arith.constant 0 : index
    %c0_16 = arith.constant 0 : index
    %19 = vector.load %arg9[%c0_15, %c0_16] : memref<4x290xbf16, #tpu.memory_space<vmem>>, vector<4x256xbf16>
    %20 = vector.broadcast %17 : vector<1x256xbf16> to vector<4x256xbf16>
    %21 = arith.mulf %19, %20 : vector<4x256xbf16>
    %c0_17 = arith.constant 0 : index
    %c0_18 = arith.constant 0 : index
    %22 = vector.load %arg10[%c0_17, %c0_18] : memref<36x256xbf16, #tpu.memory_space<vmem>>, vector<4x256xbf16>
    tpu.vector_store %arg10[%c0_17, %c0_18], %21 {strides = array<i32>} : memref<36x256xbf16, #tpu.memory_space<vmem>>, vector<4x256xbf16>,
    %c0_19 = arith.constant 0 : index
    %c1_20 = arith.constant 1 : index
    %23 = vector.load %arg9[%c0_19, %c1_20] : memref<4x290xbf16, #tpu.memory_space<vmem>>, vector<4x256xbf16>
    %c4 = arith.constant 4 : index
    %c0_21 = arith.constant 0 : index
    %24 = vector.load %arg10[%c4, %c0_21] : memref<36x256xbf16, #tpu.memory_space<vmem>>, vector<4x256xbf16>
    tpu.vector_store %arg10[%c4, %c0_21], %23 {strides = array<i32>} : memref<36x256xbf16, #tpu.memory_space<vmem>>, vector<4x256xbf16>,
    %c0_22 = arith.constant 0 : index
    %c2 = arith.constant 2 : index
    %25 = vector.load %arg9[%c0_22, %c2] : memref<4x290xbf16, #tpu.memory_space<vmem>>, vector<4x256xbf16>
    %26 = vector.broadcast %18 : vector<1x256xbf16> to vector<4x256xbf16>
    %27 = arith.mulf %25, %26 : vector<4x256xbf16>
    %c8 = arith.constant 8 : index
    %c0_23 = arith.constant 0 : index
    %28 = vector.load %arg10[%c8, %c0_23] : memref<36x256xbf16, #tpu.memory_space<vmem>>, vector<4x256xbf16>
    tpu.vector_store %arg10[%c8, %c0_23], %27 {strides = array<i32>} : memref<36x256xbf16, #tpu.memory_space<vmem>>, vector<4x256xbf16>,
    %c0_24 = arith.constant 0 : index
    %c16 = arith.constant 16 : index
    %29 = vector.load %arg9[%c0_24, %c16] : memref<4x290xbf16, #tpu.memory_space<vmem>>, vector<4x256xbf16>
    %30 = vector.broadcast %17 : vector<1x256xbf16> to vector<4x256xbf16>
    %31 = arith.mulf %29, %30 : vector<4x256xbf16>
    %c12 = arith.constant 12 : index
    %c0_25 = arith.constant 0 : index
    %32 = vector.load %arg10[%c12, %c0_25] : memref<36x256xbf16, #tpu.memory_space<vmem>>, vector<4x256xbf16>
    tpu.vector_store %arg10[%c12, %c0_25], %31 {strides = array<i32>} : memref<36x256xbf16, #tpu.memory_space<vmem>>, vector<4x256xbf16>,
    %c0_26 = arith.constant 0 : index
    %c17_27 = arith.constant 17 : index
    %33 = vector.load %arg9[%c0_26, %c17_27] : memref<4x290xbf16, #tpu.memory_space<vmem>>, vector<4x256xbf16>
    %c16_28 = arith.constant 16 : index
    %c0_29 = arith.constant 0 : index
    %34 = vector.load %arg10[%c16_28, %c0_29] : memref<36x256xbf16, #tpu.memory_space<vmem>>, vector<4x256xbf16>
    tpu.vector_store %arg10[%c16_28, %c0_29], %33 {strides = array<i32>} : memref<36x256xbf16, #tpu.memory_space<vmem>>, vector<4x256xbf16>,
    %c0_30 = arith.constant 0 : index
    %c18 = arith.constant 18 : index
    %35 = vector.load %arg9[%c0_30, %c18] : memref<4x290xbf16, #tpu.memory_space<vmem>>, vector<4x256xbf16>
    %36 = vector.broadcast %18 : vector<1x256xbf16> to vector<4x256xbf16>
    %37 = arith.mulf %35, %36 : vector<4x256xbf16>
    %c20 = arith.constant 20 : index
    %c0_31 = arith.constant 0 : index
    %38 = vector.load %arg10[%c20, %c0_31] : memref<36x256xbf16, #tpu.memory_space<vmem>>, vector<4x256xbf16>
    tpu.vector_store %arg10[%c20, %c0_31], %37 {strides = array<i32>} : memref<36x256xbf16, #tpu.memory_space<vmem>>, vector<4x256xbf16>,
    %c0_32 = arith.constant 0 : index
    %c32 = arith.constant 32 : index
    %39 = vector.load %arg9[%c0_32, %c32] : memref<4x290xbf16, #tpu.memory_space<vmem>>, vector<4x256xbf16>
    %40 = vector.broadcast %17 : vector<1x256xbf16> to vector<4x256xbf16>
    %41 = arith.mulf %39, %40 : vector<4x256xbf16>
    %c24 = arith.constant 24 : index
    %c0_33 = arith.constant 0 : index
    %42 = vector.load %arg10[%c24, %c0_33] : memref<36x256xbf16, #tpu.memory_space<vmem>>, vector<4x256xbf16>
    tpu.vector_store %arg10[%c24, %c0_33], %41 {strides = array<i32>} : memref<36x256xbf16, #tpu.memory_space<vmem>>, vector<4x256xbf16>,
    %c0_34 = arith.constant 0 : index
    %c33 = arith.constant 33 : index
    %43 = vector.load %arg9[%c0_34, %c33] : memref<4x290xbf16, #tpu.memory_space<vmem>>, vector<4x256xbf16>
    %c28 = arith.constant 28 : index
    %c0_35 = arith.constant 0 : index
    %44 = vector.load %arg10[%c28, %c0_35] : memref<36x256xbf16, #tpu.memory_space<vmem>>, vector<4x256xbf16>
    tpu.vector_store %arg10[%c28, %c0_35], %43 {strides = array<i32>} : memref<36x256xbf16, #tpu.memory_space<vmem>>, vector<4x256xbf16>,
    %c0_36 = arith.constant 0 : index
    %c34 = arith.constant 34 : index
    %45 = vector.load %arg9[%c0_36, %c34] : memref<4x290xbf16, #tpu.memory_space<vmem>>, vector<4x256xbf16>
    %46 = vector.broadcast %18 : vector<1x256xbf16> to vector<4x256xbf16>
    %47 = arith.mulf %45, %46 : vector<4x256xbf16>
    %c32_37 = arith.constant 32 : index
    %c0_38 = arith.constant 0 : index
    %48 = vector.load %arg10[%c32_37, %c0_38] : memref<36x256xbf16, #tpu.memory_space<vmem>>, vector<4x256xbf16>
    tpu.vector_store %arg10[%c32_37, %c0_38], %47 {strides = array<i32>} : memref<36x256xbf16, #tpu.memory_space<vmem>>, vector<4x256xbf16>,
    %c0_39 = arith.constant 0 : index
    %c0_40 = arith.constant 0 : index
    %49 = vector.load %arg5[%c0_39, %c0_40] : memref<4x36xbf16, #tpu.memory_space<vmem>>, vector<4x36xbf16>
    %c0_41 = arith.constant 0 : index
    %c0_42 = arith.constant 0 : index
    %50 = vector.load %arg10[%c0_41, %c0_42] : memref<36x256xbf16, #tpu.memory_space<vmem>>, vector<36x256xbf16>
    %cst_43 = arith.constant dense<0.000000e+00> : vector<4x256xf32>
    %51 = tpu.matmul %49, %50, %cst_43 {dimension_numbers = #tpu.dot_dimension_numbers<[1], [0], [0], [1], [0, 0, 1, 1], [], []>} : vector<4x36xbf16>, vector<36x256xbf16>, vector<4x256xf32> -> vector<4x256xf32>
    %cst_44 = arith.constant dense<0.000000e+00> : vector<4xf32>
    %52 = vector.multi_reduction <add>, %51, %cst_44 [1] : vector<4x256xf32> to vector<4xf32>
    %53 = vector.shape_cast %52 : vector<4xf32> to vector<4x1xf32>
    %c0_45 = arith.constant 0 : index
    %c0_46 = arith.constant 0 : index
    %c0_47 = arith.constant 0 : index
    %54 = vector.load %arg7[%c0_45, %c0_46, %c0_47] : memref<1x4x1xf32, #tpu.memory_space<vmem>>, vector<1x4x1xf32>
    %55 = vector.shape_cast %54 : vector<1x4x1xf32> to vector<4x1xf32>
    %56 = vector.shape_cast %53 : vector<4x1xf32> to vector<1x4x1xf32>
    tpu.vector_store %arg7[%c0_45, %c0_46, %c0_47], %56 {strides = array<i32>} : memref<1x4x1xf32, #tpu.memory_space<vmem>>, vector<1x4x1xf32>,
    %57 = arith.mulf %51, %51 : vector<4x256xf32>
    %cst_48 = arith.constant dense<0.000000e+00> : vector<4xf32>
    %58 = vector.multi_reduction <add>, %57, %cst_48 [1] : vector<4x256xf32> to vector<4xf32>
    %59 = vector.shape_cast %58 : vector<4xf32> to vector<4x1xf32>
    %c0_49 = arith.constant 0 : index
    %c0_50 = arith.constant 0 : index
    %c0_51 = arith.constant 0 : index
    %60 = vector.load %arg8[%c0_49, %c0_50, %c0_51] : memref<1x4x1xf32, #tpu.memory_space<vmem>>, vector<1x4x1xf32>
    %61 = vector.shape_cast %60 : vector<1x4x1xf32> to vector<4x1xf32>
    %62 = vector.shape_cast %59 : vector<4x1xf32> to vector<1x4x1xf32>
    tpu.vector_store %arg8[%c0_49, %c0_50, %c0_51], %62 {strides = array<i32>} : memref<1x4x1xf32, #tpu.memory_space<vmem>>, vector<1x4x1xf32>,
    %63 = arith.truncf %51 : vector<4x256xf32> to vector<4x256xbf16>
    %c0_52 = arith.constant 0 : index
    %c0_53 = arith.constant 0 : index
    %c0_54 = arith.constant 0 : index
    %64 = vector.load %arg6[%c0_52, %c0_53, %c0_54] : memref<1x4x256xbf16, #tpu.memory_space<vmem>>, vector<1x4x256xbf16>
    %65 = vector.shape_cast %64 : vector<1x4x256xbf16> to vector<4x256xbf16>
    %66 = vector.shape_cast %63 : vector<4x256xbf16> to vector<1x4x256xbf16>
    tpu.vector_store %arg6[%c0_52, %c0_53, %c0_54], %66 {strides = array<i32>} : memref<1x4x256xbf16, #tpu.memory_space<vmem>>, vector<1x4x256xbf16>,
    return
  }
  func.func @transform_0(%arg0: i32) -> (i32, i32, i32) {
    %c0_i32 = arith.constant 0 : i32
    %c0_i32_0 = arith.constant 0 : i32
    %c0_i32_1 = arith.constant 0 : i32
    return %arg0, %c0_i32, %c0_i32_0 : i32, i32, i32
  }
  func.func @transform_1(%arg0: i32) -> (i32, i32) {
    %c0_i32 = arith.constant 0 : i32
    %c0_i32_0 = arith.constant 0 : i32
    %c0_i32_1 = arith.constant 0 : i32
    return %c0_i32, %c0_i32_0 : i32, i32
  }
  func.func @transform_2(%arg0: i32) -> (i32, i32) {
    %c0_i32 = arith.constant 0 : i32
    %c0_i32_0 = arith.constant 0 : i32
    %c0_i32_1 = arith.constant 0 : i32
    return %c0_i32, %c0_i32_0 : i32, i32
  }
  func.func @transform_3(%arg0: i32) -> (i32, i32) {
    %c0_i32 = arith.constant 0 : i32
    %c0_i32_0 = arith.constant 0 : i32
    %c0_i32_1 = arith.constant 0 : i32
    return %c0_i32, %c0_i32_0 : i32, i32
  }
  func.func @transform_4(%arg0: i32) -> (i32, i32) {
    %c0_i32 = arith.constant 0 : i32
    %c0_i32_0 = arith.constant 0 : i32
    %c0_i32_1 = arith.constant 0 : i32
    return %c0_i32, %c0_i32_0 : i32, i32
  }
  func.func @transform_5(%arg0: i32) -> (i32, i32, i32) {
    %c0_i32 = arith.constant 0 : i32
    %c0_i32_0 = arith.constant 0 : i32
    %c0_i32_1 = arith.constant 0 : i32
    return %arg0, %c0_i32, %c0_i32_0 : i32, i32, i32
  }
  func.func @transform_6(%arg0: i32) -> (i32, i32, i32) {
    %c0_i32 = arith.constant 0 : i32
    %c0_i32_0 = arith.constant 0 : i32
    %c0_i32_1 = arith.constant 0 : i32
    return %arg0, %c0_i32, %c0_i32_0 : i32, i32, i32
  }
  func.func @transform_7(%arg0: i32) -> (i32, i32, i32) {
    %c0_i32 = arith.constant 0 : i32
    %c0_i32_0 = arith.constant 0 : i32
    %c0_i32_1 = arith.constant 0 : i32
    return %arg0, %c0_i32, %c0_i32_0 : i32, i32, i32
  }
}

module attributes {stable_mosaic.version = 11 : i64} {
  func.func @_bn_relu_kernel(%arg0: i32, %arg1: memref<1x4x256xbf16, #tpu.memory_space<vmem>>, %arg2: memref<4x1xf32, #tpu.memory_space<vmem>>, %arg3: memref<4x1xf32, #tpu.memory_space<vmem>>, %arg4: memref<1x4x256xf32, #tpu.memory_space<vmem>>) attributes {dimension_semantics = [#tpu.dimension_semantics<parallel>], iteration_bounds = array<i64: 2>, scalar_prefetch = 0 : i64, scratch_operands = 0 : i64, tpu.core_type = #tpu.core_type<tc>, window_params = [{transform_indices = @transform_0, window_bounds = array<i64: 1, 4, 256>}, {pipeline_mode = #tpu.pipeline_mode<synchronous>, transform_indices = @transform_1, window_bounds = array<i64: 4, 1>}, {pipeline_mode = #tpu.pipeline_mode<synchronous>, transform_indices = @transform_2, window_bounds = array<i64: 4, 1>}, {transform_indices = @transform_3, window_bounds = array<i64: 1, 4, 256>}]} {
    %c0 = arith.constant 0 : index
    %c0_0 = arith.constant 0 : index
    %c0_1 = arith.constant 0 : index
    %0 = vector.load %arg1[%c0, %c0_0, %c0_1] : memref<1x4x256xbf16, #tpu.memory_space<vmem>>, vector<1x4x256xbf16>
    %1 = vector.shape_cast %0 : vector<1x4x256xbf16> to vector<4x256xbf16>
    %2 = arith.extf %1 : vector<4x256xbf16> to vector<4x256xf32>
    %c0_2 = arith.constant 0 : index
    %c0_3 = arith.constant 0 : index
    %3 = vector.load %arg2[%c0_2, %c0_3] : memref<4x1xf32, #tpu.memory_space<vmem>>, vector<4x1xf32>
    %4 = vector.broadcast %3 : vector<4x1xf32> to vector<4x256xf32>
    %5 = arith.mulf %2, %4 : vector<4x256xf32>
    %c0_4 = arith.constant 0 : index
    %c0_5 = arith.constant 0 : index
    %6 = vector.load %arg3[%c0_4, %c0_5] : memref<4x1xf32, #tpu.memory_space<vmem>>, vector<4x1xf32>
    %7 = vector.broadcast %6 : vector<4x1xf32> to vector<4x256xf32>
    %8 = arith.addf %5, %7 : vector<4x256xf32>
    %cst = arith.constant 0.000000e+00 : f32
    %9 = vector.broadcast %cst : f32 to vector<4x256xf32>
    %10 = arith.maximumf %8, %9 : vector<4x256xf32>
    %c0_6 = arith.constant 0 : index
    %c0_7 = arith.constant 0 : index
    %c0_8 = arith.constant 0 : index
    %11 = vector.load %arg4[%c0_6, %c0_7, %c0_8] : memref<1x4x256xf32, #tpu.memory_space<vmem>>, vector<1x4x256xf32>
    %12 = vector.shape_cast %11 : vector<1x4x256xf32> to vector<4x256xf32>
    %13 = vector.shape_cast %10 : vector<4x256xf32> to vector<1x4x256xf32>
    tpu.vector_store %arg4[%c0_6, %c0_7, %c0_8], %13 {strides = array<i32>} : memref<1x4x256xf32, #tpu.memory_space<vmem>>, vector<1x4x256xf32>,
    return
  }
  func.func @transform_0(%arg0: i32) -> (i32, i32, i32) {
    %c0_i32 = arith.constant 0 : i32
    %c0_i32_0 = arith.constant 0 : i32
    %c0_i32_1 = arith.constant 0 : i32
    return %arg0, %c0_i32, %c0_i32_0 : i32, i32, i32
  }
  func.func @transform_1(%arg0: i32) -> (i32, i32) {
    %c0_i32 = arith.constant 0 : i32
    %c0_i32_0 = arith.constant 0 : i32
    %c0_i32_1 = arith.constant 0 : i32
    return %c0_i32, %c0_i32_0 : i32, i32
  }
  func.func @transform_2(%arg0: i32) -> (i32, i32) {
    %c0_i32 = arith.constant 0 : i32
    %c0_i32_0 = arith.constant 0 : i32
    %c0_i32_1 = arith.constant 0 : i32
    return %c0_i32, %c0_i32_0 : i32, i32
  }
  func.func @transform_3(%arg0: i32) -> (i32, i32, i32) {
    %c0_i32 = arith.constant 0 : i32
    %c0_i32_0 = arith.constant 0 : i32
    %c0_i32_1 = arith.constant 0 : i32
    return %arg0, %c0_i32, %c0_i32_0 : i32, i32, i32
  }
}

</mosaic_0001>

<llo_original>
// kernel: up_forward.5
$region0: #{up_forward.5}
  #allocation0 [shape = 'u32[]', space=smem, size = 0x4, offset = 0x4, fixed_abs, tag = 'smem constant byte address 0x4 - core index']
  #allocation1 [shape = 'u32[144,128]{1,0:T(1,128)}', space=vmem, size = 0x12000, scoped, tag = 'internal scratch']
  %s0 = inlined_call_operand.vmem [shape: bf16[2,4,256], index: 0, kind: input, shape index: {}]
  %s1 = inlined_call_operand.vmem [shape: f32[4,1], index: 1, kind: input, shape index: {}]
  %s2 = inlined_call_operand.vmem [shape: f32[4,1], index: 2, kind: input, shape index: {}]
  %s3 = inlined_call_operand.vmem [shape: f32[2,4,256], index: 3, kind: output, shape index: {}]
  %s4 = sld [smem:[#allocation0]]
  $region45: #{up_forward.5} parent=0
    _
  %s6 = ssub.s32 1, %s4
  %s7 = scalar_select 0, %s6, %s4
  loop: start=0, step=1, limit=4
  $region2: #{up_forward.5} parent=0 // loop_pre_header
    _
  $region3: #{up_forward.5} parent=0 // loop_header
    %s9 = sphi 0, %s13
    %p10 = scmp.ge.s32.totalorder %s9, 4
    %s19 = sphi 0, %s21
    %s22 = sphi 0, %s19
    %s23 = sphi 0, %s22
    %s39 = sphi 0, %s23
    %s43 = sphi 0, %s43
    %s45 = sphi 0, %s43
    %s46 = sphi 0, %s45
    %s60 = sphi 0, %s46
    %s64 = sphi 0, %s64
    %s66 = sphi 0, %s64
    %s67 = sphi 0, %s66
    %s81 = sphi 0, %s67
    %s87 = sphi 0, %s89
    %s90 = sphi 0, %s87
    %s91 = sphi 0, %s90
    %s107 = sphi 0, %s91
  $region4: #{up_forward.5} parent=0 // loop_header_branch
    %12 = sbr.rel (%p10) target = $region8
  $region5: #{up_forward.5} parent=0 // loop_body
    %s14 = ssub.s32 %s9, 1
    %s15 = ssub.s32 %s9, 2
    %s16 = sadd.s32 %s9, 1
    %s17 = ssub.s32 %s9, %s16
    %p18 = scmp.eq.s32.totalorder %s17, 0
    %s20 = sadd.s32 %s19, 1
    %s21 = scalar_select %p18, %s19, %s20
    %p24 = pneg %p18
    %p25 = scmp.eq.s32.totalorder %s9, 1
    %p26 = por %p24, %p25
    %p27 = scmp.ne.s32.totalorder %s19, %s22
    %p28 = scmp.eq.s32.totalorder %s9, 0
    %p29 = por %p27, %p28
    %p30 = scmp.ne.s32.totalorder %s19, %s22
    %p31 = scmp.eq.s32.totalorder %s14, 1
    %p32 = por %p30, %p31
    %p33 = scmp.ne.s32.totalorder %s22, %s23
    %p34 = scmp.eq.s32.totalorder %s14, 0
    %p35 = por %p33, %p34
    %p36 = scmp.ne.s32.totalorder %s22, %s23
    %p37 = scmp.eq.s32.totalorder %s15, 1
    %p38 = por %p36, %p37
    %p40 = scmp.ne.s32.totalorder %s23, %s39
    %p41 = scmp.eq.s32.totalorder %s15, 0
    %p42 = por %p40, %p41
    %s44 = sadd.s32 %s43, 1
    %p47 = scmp.eq.s32.totalorder %s9, 1
    %p48 = scmp.ne.s32.totalorder %s43, %s45
    %p49 = scmp.eq.s32.totalorder %s9, 0
    %p50 = por %p48, %p49
    %p51 = scmp.ne.s32.totalorder %s43, %s45
    %p52 = scmp.eq.s32.totalorder %s14, 1
    %p53 = por %p51, %p52
    %p54 = scmp.ne.s32.totalorder %s45, %s46
    %p55 = scmp.eq.s32.totalorder %s14, 0
    %p56 = por %p54, %p55
    %p57 = scmp.ne.s32.totalorder %s45, %s46
    %p58 = scmp.eq.s32.totalorder %s15, 1
    %p59 = por %p57, %p58
    %p61 = scmp.ne.s32.totalorder %s46, %s60
    %p62 = scmp.eq.s32.totalorder %s15, 0
    %p63 = por %p61, %p62
    %s65 = sadd.s32 %s64, 1
    %p68 = scmp.eq.s32.totalorder %s9, 1
    %p69 = scmp.ne.s32.totalorder %s64, %s66
    %p70 = scmp.eq.s32.totalorder %s9, 0
    %p71 = por %p69, %p70
    %p72 = scmp.ne.s32.totalorder %s64, %s66
    %p73 = scmp.eq.s32.totalorder %s14, 1
    %p74 = por %p72, %p73
    %p75 = scmp.ne.s32.totalorder %s66, %s67
    %p76 = scmp.eq.s32.totalorder %s14, 0
    %p77 = por %p75, %p76
    %p78 = scmp.ne.s32.totalorder %s66, %s67
    %p79 = scmp.eq.s32.totalorder %s15, 1
    %p80 = por %p78, %p79
    %p82 = scmp.ne.s32.totalorder %s67, %s81
    %p83 = scmp.eq.s32.totalorder %s15, 0
    %p84 = por %p82, %p83
    %s85 = ssub.s32 %s9, %s16
    %p86 = scmp.eq.s32.totalorder %s85, 0
    %s88 = sadd.s32 %s87, 1
    %s89 = scalar_select %p86, %s87, %s88
    %p92 = pneg %p86
    %p93 = scmp.eq.s32.totalorder %s9, 1
    %p94 = por %p92, %p93
    %p95 = scmp.ne.s32.totalorder %s87, %s90
    %p96 = scmp.eq.s32.totalorder %s9, 0
    %p97 = por %p95, %p96
    %p98 = scmp.ne.s32.totalorder %s87, %s90
    %p99 = scmp.eq.s32.totalorder %s14, 1
    %p100 = por %p98, %p99
    %p101 = scmp.ne.s32.totalorder %s90, %s91
    %p102 = scmp.eq.s32.totalorder %s14, 0
    %p103 = por %p101, %p102
    %p104 = scmp.ne.s32.totalorder %s90, %s91
    %p105 = scmp.eq.s32.totalorder %s15, 1
    %p106 = por %p104, %p105
    %p108 = scmp.ne.s32.totalorder %s91, %s107
    %p109 = scmp.eq.s32.totalorder %s15, 0
    %p110 = por %p108, %p109
    %p111 = scmp.le.s32.totalorder 1, %s9
    %p112 = scmp.lt.s32.totalorder %s9, 3
    %p113 = pnand %p111, %p112
    %p114 = pneg %p113
    // Predicated region
    $region9: #{up_forward.5} parent=5 // pred_check
      _
    $region10: #{up_forward.5} parent=5 // pred_check_branch
      %116 = sbr.rel (%p113) target = $region12
    $region11: #{up_forward.5} parent=5 // pred_region
      %s117 = ssub.s32 %s9, 1
      // Predicated region
      $region13: #{up_forward.5} parent=11 // pred_check
        %p118 = pneg %p56
      $region14: #{up_forward.5} parent=11 // pred_check_branch
        %120 = sbr.rel (%p118) target = $region16
      $region15: #{up_forward.5} parent=11 // pred_region
        _
      $region16: #{up_forward.5} parent=11 // pred_fallthru
        _
      // Predicated region
      $region17: #{up_forward.5} parent=11 // pred_check
        %p121 = pneg %p77
      $region18: #{up_forward.5} parent=11 // pred_check_branch
        %123 = sbr.rel (%p121) target = $region20
      $region19: #{up_forward.5} parent=11 // pred_region
        _
      $region20: #{up_forward.5} parent=11 // pred_fallthru
        _
    $region12: #{up_forward.5} parent=5 // pred_fallthru
      _
    %p124 = scmp.lt.s32.totalorder %s9, 2
    // Predicated region
    $region21: #{up_forward.5} parent=5 // pred_check
      %p125 = pneg %p124
    $region22: #{up_forward.5} parent=5 // pred_check_branch
      %127 = sbr.rel (%p125) target = $region24
    $region23: #{up_forward.5} parent=5 // pred_region
      // Predicated region
      $region25: #{up_forward.5} parent=23 // pred_check
        %p128 = pneg %p29
      $region26: #{up_forward.5} parent=23 // pred_check_branch
        %130 = sbr.rel (%p128) target = $region28
      $region27: #{up_forward.5} parent=23 // pred_region
        %p131 = scmp.lt.s32.totalorder %s9, 1
        %s132 = scalar_select %p131, %s9, 1
        %s133 = smul.addr %s132, 2
        %s134 = smul.addr %s133, 2
        %s135 = scalar_lea.vmem %s0, %s134
      $region28: #{up_forward.5} parent=23 // pred_fallthru
        _
    $region24: #{up_forward.5} parent=5 // pred_fallthru
      _
    %p136 = scmp.le.s32.totalorder 1, %s9
    %p137 = scmp.lt.s32.totalorder %s9, 3
    %p138 = pnand %p136, %p137
    %p139 = pneg %p138
    // Predicated region
    $region29: #{up_forward.5} parent=5 // pred_check
      _
    $region30: #{up_forward.5} parent=5 // pred_check_branch
      %141 = sbr.rel (%p138) target = $region32
    $region31: #{up_forward.5} parent=5 // pred_region
      %s142 = ssub.s32 %s9, 1
      %p143 = scmp.lt.s32.totalorder %s14, 1
      %s144 = scalar_select %p143, %s14, 1
      %s145 = smul.addr %s144, 2
      %s146 = smul.addr %s145, 2
      %s147 = scalar_lea.vmem %s0, %s146
      %p148 = pneg %p35
      %p149 = pneg %p32
      %p150 = pneg %p56
      %p151 = pneg %p53
      %p152 = pneg %p77
      %p153 = pneg %p74
      %p154 = pneg %p103
      %p155 = pneg %p100
      %p156 = scmp.lt.s32.totalorder %s14, 1
      %s157 = scalar_select %p156, %s14, 1
      %s158 = smul.addr %s157, 2
      %s159 = smul.addr %s158, 4
      %s160 = scalar_lea.vmem %s3, %s159
      %p161 = scmp.lt.s32.totalorder %s14, 1
      %s162 = scalar_select %p161, %s14, 1
      %s163 = smul.addr %s162, 2
      %s164 = smul.addr %s163, 2
      %s165 = scalar_lea.vmem %s0, %s164
      %p166 = scmp.lt.s32.totalorder %s14, 1
      %s167 = scalar_select %p166, %s14, 1
      %s168 = smul.addr %s167, 2
      %s169 = smul.addr %s168, 4
      %s170 = scalar_lea.vmem %s3, %s169
      %v171 = vld [vmem:[%s165] sm:$0xf]
      %v172 = vunpack.c.l.bf16 %v171
      %v173 = vld [vmem:[%s1] sm:$0xf]
      %175 = vset.pattern.permute.xlu0 0
      %176 = vperm.xlu0 %175, %v173
      %v177 = vpop.permute.xlu0 %176
      %v179 = vunpack.c.l.s4 839922192
      %v180 = vunpack.c.0.s8 %v179
      %v181 = vlaneseq
      %v182 = vshrl.u32 %v181, 7
      %v183 = vsub.s32 %v180, %v182
      %v184 = vrot.slane %v177, %v183
      %v186 = vmul.f32 %v172, %v184
      %v187 = vld [vmem:[%s2] sm:$0xf]
      %189 = vset.pattern.permute.xlu0 0
      %190 = vperm.xlu0 %189, %v187
      %v191 = vpop.permute.xlu0 %190
      %v193 = vunpack.c.l.s4 839922192
      %v194 = vunpack.c.0.s8 %v193
      %v195 = vlaneseq
      %v196 = vshrl.u32 %v195, 7
      %v197 = vsub.s32 %v194, %v196
      %v198 = vrot.slane %v191, %v197
      %v200 = vadd.f32 %v186, %v198
      %v201 = vmax.f32 %v200, 0.0
      %202 = vst [vmem:[%s170] sm:$0xff] %v201
      %p203 = scmp.lt.s32.totalorder %s14, 1
      %s204 = scalar_select %p203, %s14, 1
      %s205 = smul.addr %s204, 2
      %s206 = smul.addr %s205, 4
      %s207 = scalar_lea.vmem %s3, %s206
      // Predicated region
      $region33: #{up_forward.5} parent=31 // pred_check
        %p208 = pneg %p100
      $region34: #{up_forward.5} parent=31 // pred_check_branch
        %210 = sbr.rel (%p208) target = $region36
      $region35: #{up_forward.5} parent=31 // pred_region
        _
      $region36: #{up_forward.5} parent=31 // pred_fallthru
        _
    $region32: #{up_forward.5} parent=5 // pred_fallthru
      _
    %p211 = scmp.le.s32.totalorder 2, %s9
    // Predicated region
    $region37: #{up_forward.5} parent=5 // pred_check
      %p212 = pneg %p211
    $region38: #{up_forward.5} parent=5 // pred_check_branch
      %214 = sbr.rel (%p212) target = $region40
    $region39: #{up_forward.5} parent=5 // pred_region
      %s215 = ssub.s32 %s9, 2
      // Predicated region
      $region41: #{up_forward.5} parent=39 // pred_check
        %p216 = pneg %p106
      $region42: #{up_forward.5} parent=39 // pred_check_branch
        %218 = sbr.rel (%p216) target = $region44
      $region43: #{up_forward.5} parent=39 // pred_region
        %p219 = scmp.lt.s32.totalorder %s15, 1
        %s220 = scalar_select %p219, %s15, 1
        %s221 = smul.addr %s220, 2
        %s222 = smul.addr %s221, 4
        %s223 = scalar_lea.vmem %s3, %s222
      $region44: #{up_forward.5} parent=39 // pred_fallthru
        _
    $region40: #{up_forward.5} parent=5 // pred_fallthru
      _
  $region6: #{up_forward.5} parent=0 // loop_footer
    %s13 = sadd.s32 1, %s9
  $region7: #{up_forward.5} parent=0 // loop_footer_branch
    %8 = sbr.rel target = $region3
  $region8: #{up_forward.5} parent=0 // loop_exit
    _

// kernel: up_forward.4
$region0: #{up_forward.4}
  #allocation0 [shape = 'u32[]', space=smem, size = 0x4, offset = 0x4, fixed_abs, tag = 'smem constant byte address 0x4 - core index']
  #allocation1 [shape = 'u32[144,128]{1,0:T(1,128)}', space=vmem, size = 0x12000, scoped, tag = 'internal scratch']
  #allocation2 [shape = 'bf16[4,290]{1,0:T(4,128)(2,1)}', space=vmem, size = 0xc00, scoped, tag = 'scratch operand']
  #allocation3 [shape = 'bf16[36,256]{1,0:T(8,128)(2,1)}', space=vmem, size = 0x5000, scoped, tag = 'scratch operand']
  %s0 = inlined_call_operand.vmem [shape: bf16[2,4,256], index: 0, kind: input, shape index: {}]
  %s1 = inlined_call_operand.vmem [shape: bf16[2,256], index: 1, kind: input, shape index: {}]
  %s2 = inlined_call_operand.vmem [shape: f32[4,1], index: 2, kind: input, shape index: {}]
  %s3 = inlined_call_operand.vmem [shape: f32[4,1], index: 3, kind: input, shape index: {}]
  %s4 = inlined_call_operand.vmem [shape: bf16[4,36], index: 4, kind: input, shape index: {}]
  %s5 = inlined_call_operand.vmem [shape: bf16[2,4,256], index: 5, kind: output, shape index: {0}]
  %s6 = inlined_call_operand.vmem [shape: f32[2,4,1], index: 6, kind: output, shape index: {1}]
  %s7 = inlined_call_operand.vmem [shape: f32[2,4,1], index: 7, kind: output, shape index: {2}]
  %8 = xla_tuple %s5, %s6, %s7
  %s9 = sld [smem:[#allocation0]]
  $region69: #{up_forward.4} parent=0
    _
  %s11 = ssub.s32 1, %s9
  %s12 = scalar_select 0, %s11, %s9
  loop: start=0, step=1, limit=4
  $region2: #{up_forward.4} parent=0 // loop_pre_header
    _
  $region3: #{up_forward.4} parent=0 // loop_header
    %s14 = sphi 0, %s18
    %p15 = scmp.ge.s32.totalorder %s14, 4
    %s24 = sphi 0, %s26
    %s27 = sphi 0, %s24
    %s28 = sphi 0, %s27
    %s44 = sphi 0, %s28
    %s48 = sphi 0, %s48
    %s50 = sphi 0, %s48
    %s51 = sphi 0, %s50
    %s65 = sphi 0, %s51
    %s69 = sphi 0, %s69
    %s71 = sphi 0, %s69
    %s72 = sphi 0, %s71
    %s86 = sphi 0, %s72
    %s90 = sphi 0, %s90
    %s92 = sphi 0, %s90
    %s93 = sphi 0, %s92
    %s107 = sphi 0, %s93
    %s111 = sphi 0, %s111
    %s113 = sphi 0, %s111
    %s114 = sphi 0, %s113
    %s128 = sphi 0, %s114
    %s134 = sphi 0, %s136
    %s137 = sphi 0, %s134
    %s138 = sphi 0, %s137
    %s154 = sphi 0, %s138
    %s160 = sphi 0, %s162
    %s163 = sphi 0, %s160
    %s164 = sphi 0, %s163
    %s180 = sphi 0, %s164
    %s186 = sphi 0, %s188
    %s189 = sphi 0, %s186
    %s190 = sphi 0, %s189
    %s206 = sphi 0, %s190
  $region4: #{up_forward.4} parent=0 // loop_header_branch
    %17 = sbr.rel (%p15) target = $region8
  $region5: #{up_forward.4} parent=0 // loop_body
    %s19 = ssub.s32 %s14, 1
    %s20 = ssub.s32 %s14, 2
    %s21 = sadd.s32 %s14, 1
    %s22 = ssub.s32 %s14, %s21
    %p23 = scmp.eq.s32.totalorder %s22, 0
    %s25 = sadd.s32 %s24, 1
    %s26 = scalar_select %p23, %s24, %s25
    %p29 = pneg %p23
    %p30 = scmp.eq.s32.totalorder %s14, 1
    %p31 = por %p29, %p30
    %p32 = scmp.ne.s32.totalorder %s24, %s27
    %p33 = scmp.eq.s32.totalorder %s14, 0
    %p34 = por %p32, %p33
    %p35 = scmp.ne.s32.totalorder %s24, %s27
    %p36 = scmp.eq.s32.totalorder %s19, 1
    %p37 = por %p35, %p36
    %p38 = scmp.ne.s32.totalorder %s27, %s28
    %p39 = scmp.eq.s32.totalorder %s19, 0
    %p40 = por %p38, %p39
    %p41 = scmp.ne.s32.totalorder %s27, %s28
    %p42 = scmp.eq.s32.totalorder %s20, 1
    %p43 = por %p41, %p42
    %p45 = scmp.ne.s32.totalorder %s28, %s44
    %p46 = scmp.eq.s32.totalorder %s20, 0
    %p47 = por %p45, %p46
    %s49 = sadd.s32 %s48, 1
    %p52 = scmp.eq.s32.totalorder %s14, 1
    %p53 = scmp.ne.s32.totalorder %s48, %s50
    %p54 = scmp.eq.s32.totalorder %s14, 0
    %p55 = por %p53, %p54
    %p56 = scmp.ne.s32.totalorder %s48, %s50
    %p57 = scmp.eq.s32.totalorder %s19, 1
    %p58 = por %p56, %p57
    %p59 = scmp.ne.s32.totalorder %s50, %s51
    %p60 = scmp.eq.s32.totalorder %s19, 0
    %p61 = por %p59, %p60
    %p62 = scmp.ne.s32.totalorder %s50, %s51
    %p63 = scmp.eq.s32.totalorder %s20, 1
    %p64 = por %p62, %p63
    %p66 = scmp.ne.s32.totalorder %s51, %s65
    %p67 = scmp.eq.s32.totalorder %s20, 0
    %p68 = por %p66, %p67
    %s70 = sadd.s32 %s69, 1
    %p73 = scmp.eq.s32.totalorder %s14, 1
    %p74 = scmp.ne.s32.totalorder %s69, %s71
    %p75 = scmp.eq.s32.totalorder %s14, 0
    %p76 = por %p74, %p75
    %p77 = scmp.ne.s32.totalorder %s69, %s71
    %p78 = scmp.eq.s32.totalorder %s19, 1
    %p79 = por %p77, %p78
    %p80 = scmp.ne.s32.totalorder %s71, %s72
    %p81 = scmp.eq.s32.totalorder %s19, 0
    %p82 = por %p80, %p81
    %p83 = scmp.ne.s32.totalorder %s71, %s72
    %p84 = scmp.eq.s32.totalorder %s20, 1
    %p85 = por %p83, %p84
    %p87 = scmp.ne.s32.totalorder %s72, %s86
    %p88 = scmp.eq.s32.totalorder %s20, 0
    %p89 = por %p87, %p88
    %s91 = sadd.s32 %s90, 1
    %p94 = scmp.eq.s32.totalorder %s14, 1
    %p95 = scmp.ne.s32.totalorder %s90, %s92
    %p96 = scmp.eq.s32.totalorder %s14, 0
    %p97 = por %p95, %p96
    %p98 = scmp.ne.s32.totalorder %s90, %s92
    %p99 = scmp.eq.s32.totalorder %s19, 1
    %p100 = por %p98, %p99
    %p101 = scmp.ne.s32.totalorder %s92, %s93
    %p102 = scmp.eq.s32.totalorder %s19, 0
    %p103 = por %p101, %p102
    %p104 = scmp.ne.s32.totalorder %s92, %s93
    %p105 = scmp.eq.s32.totalorder %s20, 1
    %p106 = por %p104, %p105
    %p108 = scmp.ne.s32.totalorder %s93, %s107
    %p109 = scmp.eq.s32.totalorder %s20, 0
    %p110 = por %p108, %p109
    %s112 = sadd.s32 %s111, 1
    %p115 = scmp.eq.s32.totalorder %s14, 1
    %p116 = scmp.ne.s32.totalorder %s111, %s113
    %p117 = scmp.eq.s32.totalorder %s14, 0
    %p118 = por %p116, %p117
    %p119 = scmp.ne.s32.totalorder %s111, %s113
    %p120 = scmp.eq.s32.totalorder %s19, 1
    %p121 = por %p119, %p120
    %p122 = scmp.ne.s32.totalorder %s113, %s114
    %p123 = scmp.eq.s32.totalorder %s19, 0
    %p124 = por %p122, %p123
    %p125 = scmp.ne.s32.totalorder %s113, %s114
    %p126 = scmp.eq.s32.totalorder %s20, 1
    %p127 = por %p125, %p126
    %p129 = scmp.ne.s32.totalorder %s114, %s128
    %p130 = scmp.eq.s32.totalorder %s20, 0
    %p131 = por %p129, %p130
    %s132 = ssub.s32 %s14, %s21
    %p133 = scmp.eq.s32.totalorder %s132, 0
    %s135 = sadd.s32 %s134, 1
    %s136 = scalar_select %p133, %s134, %s135
    %p139 = pneg %p133
    %p140 = scmp.eq.s32.totalorder %s14, 1
    %p141 = por %p139, %p140
    %p142 = scmp.ne.s32.totalorder %s134, %s137
    %p143 = scmp.eq.s32.totalorder %s14, 0
    %p144 = por %p142, %p143
    %p145 = scmp.ne.s32.totalorder %s134, %s137
    %p146 = scmp.eq.s32.totalorder %s19, 1
    %p147 = por %p145, %p146
    %p148 = scmp.ne.s32.totalorder %s137, %s138
    %p149 = scmp.eq.s32.totalorder %s19, 0
    %p150 = por %p148, %p149
    %p151 = scmp.ne.s32.totalorder %s137, %s138
    %p152 = scmp.eq.s32.totalorder %s20, 1
    %p153 = por %p151, %p152
    %p155 = scmp.ne.s32.totalorder %s138, %s154
    %p156 = scmp.eq.s32.totalorder %s20, 0
    %p157 = por %p155, %p156
    %s158 = ssub.s32 %s14, %s21
    %p159 = scmp.eq.s32.totalorder %s158, 0
    %s161 = sadd.s32 %s160, 1
    %s162 = scalar_select %p159, %s160, %s161
    %p165 = pneg %p159
    %p166 = scmp.eq.s32.totalorder %s14, 1
    %p167 = por %p165, %p166
    %p168 = scmp.ne.s32.totalorder %s160, %s163
    %p169 = scmp.eq.s32.totalorder %s14, 0
    %p170 = por %p168, %p169
    %p171 = scmp.ne.s32.totalorder %s160, %s163
    %p172 = scmp.eq.s32.totalorder %s19, 1
    %p173 = por %p171, %p172
    %p174 = scmp.ne.s32.totalorder %s163, %s164
    %p175 = scmp.eq.s32.totalorder %s19, 0
    %p176 = por %p174, %p175
    %p177 = scmp.ne.s32.totalorder %s163, %s164
    %p178 = scmp.eq.s32.totalorder %s20, 1
    %p179 = por %p177, %p178
    %p181 = scmp.ne.s32.totalorder %s164, %s180
    %p182 = scmp.eq.s32.totalorder %s20, 0
    %p183 = por %p181, %p182
    %s184 = ssub.s32 %s14, %s21
    %p185 = scmp.eq.s32.totalorder %s184, 0
    %s187 = sadd.s32 %s186, 1
    %s188 = scalar_select %p185, %s186, %s187
    %p191 = pneg %p185
    %p192 = scmp.eq.s32.totalorder %s14, 1
    %p193 = por %p191, %p192
    %p194 = scmp.ne.s32.totalorder %s186, %s189
    %p195 = scmp.eq.s32.totalorder %s14, 0
    %p196 = por %p194, %p195
    %p197 = scmp.ne.s32.totalorder %s186, %s189
    %p198 = scmp.eq.s32.totalorder %s19, 1
    %p199 = por %p197, %p198
    %p200 = scmp.ne.s32.totalorder %s189, %s190
    %p201 = scmp.eq.s32.totalorder %s19, 0
    %p202 = por %p200, %p201
    %p203 = scmp.ne.s32.totalorder %s189, %s190
    %p204 = scmp.eq.s32.totalorder %s20, 1
    %p205 = por %p203, %p204
    %p207 = scmp.ne.s32.totalorder %s190, %s206
    %p208 = scmp.eq.s32.totalorder %s20, 0
    %p209 = por %p207, %p208
    %p210 = scmp.le.s32.totalorder 1, %s14
    %p211 = scmp.lt.s32.totalorder %s14, 3
    %p212 = pnand %p210, %p211
    %p213 = pneg %p212
    // Predicated region
    $region9: #{up_forward.4} parent=5 // pred_check
      _
    $region10: #{up_forward.4} parent=5 // pred_check_branch
      %215 = sbr.rel (%p212) target = $region12
    $region11: #{up_forward.4} parent=5 // pred_region
      %s216 = ssub.s32 %s14, 1
      // Predicated region
      $region13: #{up_forward.4} parent=11 // pred_check
        %p217 = pneg %p61
      $region14: #{up_forward.4} parent=11 // pred_check_branch
        %219 = sbr.rel (%p217) target = $region16
      $region15: #{up_forward.4} parent=11 // pred_region
        _
      $region16: #{up_forward.4} parent=11 // pred_fallthru
        _
      // Predicated region
      $region17: #{up_forward.4} parent=11 // pred_check
        %p220 = pneg %p82
      $region18: #{up_forward.4} parent=11 // pred_check_branch
        %222 = sbr.rel (%p220) target = $region20
      $region19: #{up_forward.4} parent=11 // pred_region
        _
      $region20: #{up_forward.4} parent=11 // pred_fallthru
        _
      // Predicated region
      $region21: #{up_forward.4} parent=11 // pred_check
        %p223 = pneg %p103
      $region22: #{up_forward.4} parent=11 // pred_check_branch
        %225 = sbr.rel (%p223) target = $region24
      $region23: #{up_forward.4} parent=11 // pred_region
        _
      $region24: #{up_forward.4} parent=11 // pred_fallthru
        _
      // Predicated region
      $region25: #{up_forward.4} parent=11 // pred_check
        %p226 = pneg %p124
      $region26: #{up_forward.4} parent=11 // pred_check_branch
        %228 = sbr.rel (%p226) target = $region28
      $region27: #{up_forward.4} parent=11 // pred_region
        _
      $region28: #{up_forward.4} parent=11 // pred_fallthru
        _
    $region12: #{up_forward.4} parent=5 // pred_fallthru
      _
    %p229 = scmp.lt.s32.totalorder %s14, 2
    // Predicated region
    $region29: #{up_forward.4} parent=5 // pred_check
      %p230 = pneg %p229
    $region30: #{up_forward.4} parent=5 // pred_check_branch
      %232 = sbr.rel (%p230) target = $region32
    $region31: #{up_forward.4} parent=5 // pred_region
      // Predicated region
      $region33: #{up_forward.4} parent=31 // pred_check
        %p233 = pneg %p34
      $region34: #{up_forward.4} parent=31 // pred_check_branch
        %235 = sbr.rel (%p233) target = $region36
      $region35: #{up_forward.4} parent=31 // pred_region
        %p236 = scmp.lt.s32.totalorder %s14, 1
        %s237 = scalar_select %p236, %s14, 1
        %s238 = smul.addr %s237, 2
        %s239 = smul.addr %s238, 2
        %s240 = scalar_lea.vmem %s0, %s239
      $region36: #{up_forward.4} parent=31 // pred_fallthru
        _
    $region32: #{up_forward.4} parent=5 // pred_fallthru
      _
    %p241 = scmp.le.s32.totalorder 1, %s14
    %p242 = scmp.lt.s32.totalorder %s14, 3
    %p243 = pnand %p241, %p242
    %p244 = pneg %p243
    // Predicated region
    $region37: #{up_forward.4} parent=5 // pred_check
      _
    $region38: #{up_forward.4} parent=5 // pred_check_branch
      %246 = sbr.rel (%p243) target = $region40
    $region39: #{up_forward.4} parent=5 // pred_region
      %s247 = ssub.s32 %s14, 1
      %p248 = scmp.lt.s32.totalorder %s19, 1
      %s249 = scalar_select %p248, %s19, 1
      %s250 = smul.addr %s249, 2
      %s251 = smul.addr %s250, 2
      %s252 = scalar_lea.vmem %s0, %s251
      %p253 = pneg %p40
      %p254 = pneg %p37
      %p255 = pneg %p61
      %p256 = pneg %p58
      %p257 = pneg %p82
      %p258 = pneg %p79
      %p259 = pneg %p103
      %p260 = pneg %p100
      %p261 = pneg %p124
      %p262 = pneg %p121
      %p263 = pneg %p150
      %p264 = pneg %p147
      %p265 = scmp.lt.s32.totalorder %s19, 1
      %s266 = scalar_select %p265, %s19, 1
      %s267 = smul.addr %s266, 2
      %s268 = smul.addr %s267, 2
      %s269 = scalar_lea.vmem %s5, %s268
      %p270 = pneg %p176
      %p271 = pneg %p173
      %p272 = scmp.lt.s32.totalorder %s19, 1
      %s273 = scalar_select %p272, %s19, 1
      %s274 = smul.addr %s273, 4
      %s275 = scalar_lea.vmem %s6, %s274
      %p276 = pneg %p202
      %p277 = pneg %p199
      %p278 = scmp.lt.s32.totalorder %s19, 1
      %s279 = scalar_select %p278, %s19, 1
      %s280 = smul.addr %s279, 4
      %s281 = scalar_lea.vmem %s7, %s280
      %p282 = scmp.lt.s32.totalorder %s19, 1
      %s283 = scalar_select %p282, %s19, 1
      %s284 = smul.addr %s283, 2
      %s285 = smul.addr %s284, 2
      %s286 = scalar_lea.vmem %s0, %s285
      %p287 = scmp.lt.s32.totalorder %s19, 1
      %s288 = scalar_select %p287, %s19, 1
      %s289 = smul.addr %s288, 2
      %s290 = smul.addr %s289, 2
      %s291 = scalar_lea.vmem %s5, %s290
      %p292 = scmp.lt.s32.totalorder %s19, 1
      %s293 = scalar_select %p292, %s19, 1
      %s294 = smul.addr %s293, 4
      %s295 = scalar_lea.vmem %s6, %s294
      %p296 = scmp.lt.s32.totalorder %s19, 1
      %s297 = scalar_select %p296, %s19, 1
      %s298 = smul.addr %s297, 4
      %s299 = scalar_lea.vmem %s7, %s298
      %v301 = vld [vmem:[%s286] sm:$0xf]
      %v302 = vunpack.c.l.bf16 %v301
      %v303 = vld [vmem:[%s2] sm:$0xf]
      %305 = vset.pattern.permute.xlu0 0
      %306 = vperm.xlu0 %305, %v303
      %v307 = vpop.permute.xlu0 %306
      %v309 = vunpack.c.l.s4 839922192
      %v310 = vunpack.c.0.s8 %v309
      %v311 = vlaneseq
      %v312 = vshrl.u32 %v311, 7
      %v313 = vsub.s32 %v310, %v312
      %v314 = vrot.slane %v307, %v313
      %v316 = vmul.f32 %v302, %v314
      %v317 = vld [vmem:[%s3] sm:$0xf]
      %319 = vset.pattern.permute.xlu0 0
      %320 = vperm.xlu0 %319, %v317
      %v321 = vpop.permute.xlu0 %320
      %v323 = vunpack.c.l.s4 839922192
      %v324 = vunpack.c.0.s8 %v323
      %v325 = vlaneseq
      %v326 = vshrl.u32 %v325, 7
      %v327 = vsub.s32 %v324, %v326
      %v328 = vrot.slane %v321, %v327
      %v330 = vadd.f32 %v316, %v328
      %v331 = vmax.f32 %v330, 0.0
      %v333 = vcombine.high %v331, %v331
      %v335 = vpack.c.bf16 %v331, %v331
      %v336 = vpack.c.bf16 %v333, %v333
      %vm337 = vcmask 132096
      %338 = vst.msk [vmem:[#allocation2] sm:$0x3] %vm337, 0
      %vm339 = vcmask 271496
      %340 = vst.msk [vmem:[#allocation2 + $0x4] sm:$0x3] %vm339, 0
      %v343 = vcombine.low %v335, %v336
      %v345 = vunpack.c.l.s4 1983009808
      %v346 = vunpack.c.0.s8 %v345
      %v347 = vlaneseq
      %v348 = vshrl.u32 %v347, 7
      %v349 = vsub.s32 %v346, %v348
      %v350 = vrot.slane %v343, %v349
      %351 = vrot.lane.b32.xlu0 %v350, 17
      %v352 = vpop.permute.xlu0 %351
      %v353 = vrot.slane %v352, 6
      %vm354 = vcmask 138240
      %v355 = vsel %vm354, %v353, %v352
      %vm357 = vcmask 1041544
      %vm358 = vcmask 1043458
      %vm359 = vmor %vm358, %vm357
      %vm360 = vcmask 136196
      %vm361 = vmor %vm360, %vm359
      %362 = vst.msk [vmem:[#allocation2] sm:$0x3f] %vm361, %v355
      %v363 = vld [vmem:[%s1] sm:$0x3]
      %v364 = vld [vmem:[#allocation2] sm:$0xf]
      %v367 = vunpack.c.l.s4 1966171168
      %v368 = vunpack.c.0.s8 %v367
      %v369 = vlaneseq
      %v370 = vshrl.u32 %v369, 7
      %v371 = vsub.s32 %v368, %v370
      %v372 = vrot.slane %v363, %v371
      %v373 = vcombine.high %v372, %v372
      %v375 = vunpack.c.l.s4 1966171168
      %v376 = vunpack.c.0.s8 %v375
      %v377 = vlaneseq
      %v378 = vshrl.u32 %v377, 7
      %v379 = vsub.s32 %v376, %v378
      %v380 = vrot.slane %v372, %v379
      %v382 = vunpack.c.l.s4 1966171168
      %v383 = vunpack.c.0.s8 %v382
      %v384 = vlaneseq
      %v385 = vshrl.u32 %v384, 7
      %v386 = vsub.s32 %v383, %v385
      %v387 = vrot.slane %v373, %v386
      %v389 = vpack.i.b16 %v380, %v380
      %v391 = vlaneseq
      %v392 = vshrl.u32 %v391, 7
      %v393 = vsub.s32 0, %v392
      %v394 = vrot.slane %v389, %v393
      %v396 = vpack.i.b16 %v387, %v387
      %v398 = vlaneseq
      %v399 = vshrl.u32 %v398, 7
      %v400 = vsub.s32 0, %v399
      %v401 = vrot.slane %v396, %v400
      %v404 = vcombine.low %v394, %v401
      %v406 = vunpack.c.l.s4 1983009808
      %v407 = vunpack.c.0.s8 %v406
      %v408 = vlaneseq
      %v409 = vshrl.u32 %v408, 7
      %v410 = vsub.s32 %v407, %v409
      %v411 = vrot.slane %v404, %v410
      %v413 = vmul.bf16 %v364, %v411
      %v416 = vunpack.c.l.s4 1983009808
      %v417 = vunpack.c.0.s8 %v416
      %v418 = vlaneseq
      %v419 = vshrl.u32 %v418, 7
      %v420 = vsub.s32 %v417, %v419
      %v421 = vrot.slane %v413, %v420
      %423 = vst [vmem:[#allocation3] sm:$0x33] %v421
      %v424 = vld [vmem:[#allocation2] sm:$0x3f]
      %v426 = vcombine.low %v424, %v424
      %v428 = vunpack.c.l.s4 1983009808
      %v429 = vunpack.c.0.s8 %v428
      %v430 = vlaneseq
      %v431 = vshrl.u32 %v430, 7
      %v432 = vsub.s32 %v429, %v431
      %v433 = vrot.slane %v426, %v432
      %v435 = vunpack.c.l.s4 1983009808
      %v436 = vunpack.c.0.s8 %v435
      %v437 = vlaneseq
      %v438 = vshrl.u32 %v437, 7
      %v439 = vsub.s32 %v436, %v438
      %v440 = vrot.slane %v424, %v439
      %441 = vrot.lane.b32.xlu0 %v433, 127
      %v442 = vpop.permute.xlu0 %441
      %443 = vrot.lane.b32.xlu0 %v440, 127
      %v444 = vpop.permute.xlu0 %443
      %v445 = vrot.slane %v442, 4
      %v446 = vrot.slane %v444, 4
      %vm447 = vcmask 1043456
      %v448 = vsel %vm447, %v445, %v446
      %vm449 = vcmask 1039360
      %v450 = vsel %vm449, %v442, %v448
      %452 = vst [vmem:[#allocation3] sm:$0xcc] %v450
      %v453 = vld [vmem:[#allocation2] sm:$0x3f]
      %v454 = vshrl.u32 %v380, 16
      %v455 = vpack.i.b16 %v454, %v454
      %v457 = vlaneseq
      %v458 = vshrl.u32 %v457, 7
      %v459 = vsub.s32 0, %v458
      %v460 = vrot.slane %v455, %v459
      %v461 = vshrl.u32 %v387, 16
      %v462 = vpack.i.b16 %v461, %v461
      %v464 = vlaneseq
      %v465 = vshrl.u32 %v464, 7
      %v466 = vsub.s32 0, %v465
      %v467 = vrot.slane %v462, %v466
      %v470 = vcombine.low %v460, %v467
      %v472 = vunpack.c.l.s4 1983009808
      %v473 = vunpack.c.0.s8 %v472
      %v474 = vlaneseq
      %v475 = vshrl.u32 %v474, 7
      %v476 = vsub.s32 %v473, %v475
      %v477 = vrot.slane %v470, %v476
      %478 = vrot.lane.b32.xlu0 %v477, 2
      %v479 = vpop.permute.xlu0 %478
      %v480 = vrot.slane %v479, 6
      %vm481 = vcmask 15360
      %v482 = vsel %vm481, %v480, %v479
      %v484 = vmul.bf16 %v453, %v482
      %v486 = vcombine.high %v484, %v484
      %v488 = vunpack.c.l.s4 1983009808
      %v489 = vunpack.c.0.s8 %v488
      %v490 = vlaneseq
      %v491 = vshrl.u32 %v490, 7
      %v492 = vsub.s32 %v489, %v491
      %v493 = vrot.slane %v484, %v492
      %v495 = vunpack.c.l.s4 1983009808
      %v496 = vunpack.c.0.s8 %v495
      %v497 = vlaneseq
      %v498 = vshrl.u32 %v497, 7
      %v499 = vsub.s32 %v496, %v498
      %v500 = vrot.slane %v486, %v499
      %501 = vrot.lane.b32.xlu0 %v493, 126
      %v502 = vpop.permute.xlu0 %501
      %503 = vrot.lane.b32.xlu0 %v500, 126
      %v504 = vpop.permute.xlu0 %503
      %v505 = vrot.slane %v502, 4
      %v506 = vrot.slane %v504, 4
      %v507 = vsel %vm447, %v505, %v506
      %vm508 = vcmask 1031168
      %v509 = vsel %vm508, %v502, %v507
      %511 = vst [vmem:[#allocation3 + $0x8] sm:$0x33] %v509
      %v512 = vld [vmem:[#allocation2] sm:$0x3f]
      %513 = vrot.lane.b32.xlu0 %v411, 16
      %v514 = vpop.permute.xlu0 %513
      %v515 = vrot.slane %v514, 6
      %vm516 = vcmask 130048
      %v517 = vsel %vm516, %v515, %v514
      %v519 = vmul.bf16 %v512, %v517
      %v521 = vcombine.low %v519, %v519
      %v523 = vunpack.c.l.s4 1983009808
      %v524 = vunpack.c.0.s8 %v523
      %v525 = vlaneseq
      %v526 = vshrl.u32 %v525, 7
      %v527 = vsub.s32 %v524, %v526
      %v528 = vrot.slane %v521, %v527
      %v530 = vunpack.c.l.s4 1983009808
      %v531 = vunpack.c.0.s8 %v530
      %v532 = vlaneseq
      %v533 = vshrl.u32 %v532, 7
      %v534 = vsub.s32 %v531, %v533
      %v535 = vrot.slane %v519, %v534
      %536 = vrot.lane.b32.xlu0 %v528, 112
      %v537 = vpop.permute.xlu0 %536
      %538 = vrot.lane.b32.xlu0 %v535, 112
      %v539 = vpop.permute.xlu0 %538
      %v540 = vrot.slane %v537, 4
      %v541 = vrot.slane %v539, 4
      %v542 = vsel %vm447, %v540, %v541
      %vm543 = vcmask 916480
      %v544 = vsel %vm543, %v537, %v542
      %546 = vst [vmem:[#allocation3 + $0x8] sm:$0xcc] %v544
      %v547 = vld [vmem:[#allocation2] sm:$0x3f]
      %v549 = vcombine.high %v547, %v547
      %v551 = vunpack.c.l.s4 1983009808
      %v552 = vunpack.c.0.s8 %v551
      %v553 = vlaneseq
      %v554 = vshrl.u32 %v553, 7
      %v555 = vsub.s32 %v552, %v554
      %v556 = vrot.slane %v547, %v555
      %v558 = vunpack.c.l.s4 1983009808
      %v559 = vunpack.c.0.s8 %v558
      %v560 = vlaneseq
      %v561 = vshrl.u32 %v560, 7
      %v562 = vsub.s32 %v559, %v561
      %v563 = vrot.slane %v549, %v562
      %564 = vrot.lane.b32.xlu0 %v556, 111
      %v565 = vpop.permute.xlu0 %564
      %566 = vrot.lane.b32.xlu0 %v563, 111
      %v567 = vpop.permute.xlu0 %566
      %v568 = vrot.slane %v565, 4
      %v569 = vrot.slane %v567, 4
      %v570 = vsel %vm447, %v568, %v569
      %vm571 = vcmask 908288
      %v572 = vsel %vm571, %v565, %v570
      %574 = vst [vmem:[#allocation3 + $0x10] sm:$0x33] %v572
      %v575 = vld [vmem:[#allocation2] sm:$0x3f]
      %576 = vrot.lane.b32.xlu0 %v477, 18
      %v577 = vpop.permute.xlu0 %576
      %v578 = vrot.slane %v577, 6
      %vm579 = vcmask 146432
      %v580 = vsel %vm579, %v578, %v577
      %v582 = vmul.bf16 %v575, %v580
      %v584 = vcombine.low %v582, %v582
      %v586 = vunpack.c.l.s4 1983009808
      %v587 = vunpack.c.0.s8 %v586
      %v588 = vlaneseq
      %v589 = vshrl.u32 %v588, 7
      %v590 = vsub.s32 %v587, %v589
      %v591 = vrot.slane %v584, %v590
      %v593 = vunpack.c.l.s4 1983009808
      %v594 = vunpack.c.0.s8 %v593
      %v595 = vlaneseq
      %v596 = vshrl.u32 %v595, 7
      %v597 = vsub.s32 %v594, %v596
      %v598 = vrot.slane %v582, %v597
      %599 = vrot.lane.b32.xlu0 %v591, 110
      %v600 = vpop.permute.xlu0 %599
      %601 = vrot.lane.b32.xlu0 %v598, 110
      %v602 = vpop.permute.xlu0 %601
      %v603 = vrot.slane %v600, 4
      %v604 = vrot.slane %v602, 4
      %v605 = vsel %vm447, %v603, %v604
      %vm606 = vcmask 900096
      %v607 = vsel %vm606, %v600, %v605
      %609 = vst [vmem:[#allocation3 + $0x10] sm:$0xcc] %v607
      %v610 = vld [vmem:[#allocation2] sm:$0x3f]
      %611 = vrot.lane.b32.xlu0 %v411, 32
      %v612 = vpop.permute.xlu0 %611
      %v613 = vrot.slane %v612, 6
      %vm614 = vcmask 261120
      %v615 = vsel %vm614, %v613, %v612
      %v617 = vmul.bf16 %v610, %v615
      %v619 = vcombine.high %v617, %v617
      %v621 = vunpack.c.l.s4 1983009808
      %v622 = vunpack.c.0.s8 %v621
      %v623 = vlaneseq
      %v624 = vshrl.u32 %v623, 7
      %v625 = vsub.s32 %v622, %v624
      %v626 = vrot.slane %v617, %v625
      %v628 = vunpack.c.l.s4 1983009808
      %v629 = vunpack.c.0.s8 %v628
      %v630 = vlaneseq
      %v631 = vshrl.u32 %v630, 7
      %v632 = vsub.s32 %v629, %v631
      %v633 = vrot.slane %v619, %v632
      %634 = vrot.lane.b32.xlu0 %v626, 96
      %v635 = vpop.permute.xlu0 %634
      %636 = vrot.lane.b32.xlu0 %v633, 96
      %v637 = vpop.permute.xlu0 %636
      %v638 = vrot.slane %v635, 4
      %v639 = vrot.slane %v637, 4
      %v640 = vsel %vm447, %v638, %v639
      %vm641 = vcmask 785408
      %v642 = vsel %vm641, %v635, %v640
      %644 = vst [vmem:[#allocation3 + $0x18] sm:$0x33] %v642
      %v645 = vld [vmem:[#allocation2] sm:$0x3f]
      %v647 = vcombine.low %v645, %v645
      %v649 = vunpack.c.l.s4 1983009808
      %v650 = vunpack.c.0.s8 %v649
      %v651 = vlaneseq
      %v652 = vshrl.u32 %v651, 7
      %v653 = vsub.s32 %v650, %v652
      %v654 = vrot.slane %v647, %v653
      %v656 = vunpack.c.l.s4 1983009808
      %v657 = vunpack.c.0.s8 %v656
      %v658 = vlaneseq
      %v659 = vshrl.u32 %v658, 7
      %v660 = vsub.s32 %v657, %v659
      %v661 = vrot.slane %v645, %v660
      %662 = vrot.lane.b32.xlu0 %v654, 95
      %v663 = vpop.permute.xlu0 %662
      %664 = vrot.lane.b32.xlu0 %v661, 95
      %v665 = vpop.permute.xlu0 %664
      %v666 = vrot.slane %v663, 4
      %v667 = vrot.slane %v665, 4
      %v668 = vsel %vm447, %v666, %v667
      %vm669 = vcmask 777216
      %v670 = vsel %vm669, %v663, %v668
      %672 = vst [vmem:[#allocation3 + $0x18] sm:$0xcc] %v670
      %v673 = vld [vmem:[#allocation2] sm:$0x3f]
      %674 = vrot.lane.b32.xlu0 %v477, 34
      %v675 = vpop.permute.xlu0 %674
      %v676 = vrot.slane %v675, 6
      %vm677 = vcmask 277504
      %v678 = vsel %vm677, %v676, %v675
      %v680 = vmul.bf16 %v673, %v678
      %v682 = vcombine.high %v680, %v680
      %v684 = vunpack.c.l.s4 1983009808
      %v685 = vunpack.c.0.s8 %v684
      %v686 = vlaneseq
      %v687 = vshrl.u32 %v686, 7
      %v688 = vsub.s32 %v685, %v687
      %v689 = vrot.slane %v680, %v688
      %v691 = vunpack.c.l.s4 1983009808
      %v692 = vunpack.c.0.s8 %v691
      %v693 = vlaneseq
      %v694 = vshrl.u32 %v693, 7
      %v695 = vsub.s32 %v692, %v694
      %v696 = vrot.slane %v682, %v695
      %697 = vrot.lane.b32.xlu0 %v689, 94
      %v698 = vpop.permute.xlu0 %697
      %699 = vrot.lane.b32.xlu0 %v696, 94
      %v700 = vpop.permute.xlu0 %699
      %v701 = vrot.slane %v698, 4
      %v702 = vrot.slane %v700, 4
      %v703 = vsel %vm447, %v701, %v702
      %vm704 = vcmask 769024
      %v705 = vsel %vm704, %v698, %v703
      %707 = vst [vmem:[#allocation3 + $0x20] sm:$0x33] %v705
      %v708 = vld [vmem:[%s4] sm:$0x3]
      %v709 = vld [vmem:[#allocation3] sm:$0xff]
      %v710 = vld [vmem:[#allocation3 + $0x8] sm:$0xff]
      %v711 = vld [vmem:[#allocation3 + $0x10] sm:$0xff]
      %v712 = vld [vmem:[#allocation3 + $0x18] sm:$0xff]
      %v713 = vld [vmem:[#allocation3 + $0x20] sm:$0x33]
      %v719 = vunpack.c.l.b16 %v709
      %v720 = vunpack.c.h.b16 %v709
      %v721 = vunpack.c.l.b16 %v710
      %v722 = vunpack.c.h.b16 %v710
      %v723 = vunpack.c.l.b16 %v711
      %v724 = vunpack.c.h.b16 %v711
      %v725 = vunpack.c.l.b16 %v712
      %v726 = vunpack.c.h.b16 %v712
      %v727 = vunpack.c.l.b16 %v713
      %v728 = vunpack.c.h.b16 %v713
      %v729 = vpack.c.b16 %v721, %v719
      %v730 = vpack.c.b16 %v722, %v720
      %v731 = vpack.c.b16 %v725, %v723
      %v732 = vpack.c.b16 %v726, %v724
      %v733 = vpack.c.b16 %v727, %v727
      %v734 = vpack.c.b16 %v728, %v728
      %vm739 = vcmask 293888
      %v741 = vsel %vm739, %v708, 0
      %vm743 = vcmask 1041408
      %v745 = vsel %vm743, %v733, 0
      %v748 = vsel %vm743, %v734, 0
      %750 = vmatprep.subr.bf16.mxu0 0
      %751 = vmatpush1.bf16.msra.mxu0 0
      %752 = vmatprep.subr.bf16.mxu0 0
      %753 = vmatpush1.bf16.msra.mxu0 0
      %754 = vmatprep.subr.bf16.mxu0 0
      %755 = vmatpush1.bf16.msra.mxu0 0
      %756 = vmatprep.subr.bf16.mxu0 0
      %757 = vmatpush1.bf16.msra.mxu0 0
      %758 = vmatprep.subr.bf16.mxu0 0
      %759 = vmatpush1.bf16.msra.mxu0 0
      %760 = vmatprep.subr.bf16.mxu0 %v748
      %761 = vmatpush1.bf16.msra.mxu0 %v745
      %762 = vmatprep.subr.bf16.mxu0 %v732
      %763 = vmatpush1.bf16.msra.mxu0 %v731
      %764 = vmatprep.subr.bf16.mxu0 %v730
      %765 = vmatpush1.bf16.msra.mxu0 %v729
      %766 = vmatprep.subr.bf16.mxu0 0
      %767 = vmatpush2.bf16.msra.mxu0 0
      %768 = vmatprep.subr.bf16.mxu0 0
      %769 = vmatpush2.bf16.msra.mxu0 0
      %770 = vmatprep.subr.bf16.mxu0 0
      %771 = vmatpush2.bf16.msra.mxu0 0
      %772 = vmatprep.subr.bf16.mxu0 0
      %773 = vmatpush2.bf16.msra.mxu0 0
      %774 = vmatprep.subr.bf16.mxu0 0
      %775 = vmatpush2.bf16.msra.mxu0 0
      %776 = vmatprep.subr.bf16.mxu0 0
      %777 = vmatpush2.bf16.msra.mxu0 0
      %778 = vmatprep.subr.bf16.mxu0 0
      %779 = vmatpush2.bf16.msra.mxu0 0
      %780 = vmatprep.subr.bf16.mxu0 0
      %781 = vmatpush2.bf16.msra.mxu0 0
      %782 = vmatprep.mubr.bf16.mxu0 0
      %783 = vmatmul.mubr.bf16.gmra.mxu0 %v741
      %v784 = vpop.f32.mrf.mxu0
      %v785 = vadd.f32 0.0, %v784
      %v786 = vpop.f32.mrf.mxu0
      %v787 = vadd.f32 0.0, %v786
      %v788 = vpop.f32.mrf.mxu0
      %v789 = vpop.f32.mrf.mxu0
      %790 = vdwg.mxu0
      %vm791 = vcmask 1043456
      %v792 = vsel %vm791, %v785, 0.0
      %v793 = vsel %vm791, %v787, 0.0
      %v794 = vadd.f32 %v792, %v793
      %795 = vadd.xlane.f32.xlu0 %v794
      %v796 = vpop.xlane.xlu0 %795
      %vm797 = vcmask 3072
      %798 = vst.msk [vmem:[%s295] sm:$0xf] %vm797, %v796
      %v799 = vmul.f32 %v785, %v785
      %v800 = vmul.f32 %v787, %v787
      %v801 = vsel %vm791, %v799, 0.0
      %v802 = vsel %vm791, %v800, 0.0
      %v803 = vadd.f32 %v801, %v802
      %804 = vadd.xlane.f32.xlu0 %v803
      %v805 = vpop.xlane.xlu0 %804
      %806 = vst.msk [vmem:[%s299] sm:$0xf] %vm797, %v805
      %v807 = vpack.c.bf16 %v785, %v785
      %v808 = vpack.c.bf16 %v787, %v787
      %v811 = vcombine.low %v807, %v808
      %v813 = vunpack.c.l.s4 1983009808
      %v814 = vunpack.c.0.s8 %v813
      %v815 = vlaneseq
      %v816 = vshrl.u32 %v815, 7
      %v817 = vsub.s32 %v814, %v816
      %v818 = vrot.slane %v811, %v817
      %820 = vst [vmem:[%s291] sm:$0xf] %v818
      %p821 = scmp.lt.s32.totalorder %s19, 1
      %s822 = scalar_select %p821, %s19, 1
      %s823 = smul.addr %s822, 2
      %s824 = smul.addr %s823, 2
      %s825 = scalar_lea.vmem %s5, %s824
      %p826 = scmp.lt.s32.totalorder %s19, 1
      %s827 = scalar_select %p826, %s19, 1
      %s828 = smul.addr %s827, 4
      %s829 = scalar_lea.vmem %s6, %s828
      %p830 = scmp.lt.s32.totalorder %s19, 1
      %s831 = scalar_select %p830, %s19, 1
      %s832 = smul.addr %s831, 4
      %s833 = scalar_lea.vmem %s7, %s832
      // Predicated region
      $region41: #{up_forward.4} parent=39 // pred_check
        %p834 = pneg %p147
      $region42: #{up_forward.4} parent=39 // pred_check_branch
        %836 = sbr.rel (%p834) target = $region44
      $region43: #{up_forward.4} parent=39 // pred_region
        _
      $region44: #{up_forward.4} parent=39 // pred_fallthru
        _
      // Predicated region
      $region45: #{up_forward.4} parent=39 // pred_check
        %p837 = pneg %p173
      $region46: #{up_forward.4} parent=39 // pred_check_branch
        %839 = sbr.rel (%p837) target = $region48
      $region47: #{up_forward.4} parent=39 // pred_region
        _
      $region48: #{up_forward.4} parent=39 // pred_fallthru
        _
      // Predicated region
      $region49: #{up_forward.4} parent=39 // pred_check
        %p840 = pneg %p199
      $region50: #{up_forward.4} parent=39 // pred_check_branch
        %842 = sbr.rel (%p840) target = $region52
      $region51: #{up_forward.4} parent=39 // pred_region
        _
      $region52: #{up_forward.4} parent=39 // pred_fallthru
        _
    $region40: #{up_forward.4} parent=5 // pred_fallthru
      _
    %p843 = scmp.le.s32.totalorder 2, %s14
    // Predicated region
    $region53: #{up_forward.4} parent=5 // pred_check
      %p844 = pneg %p843
    $region54: #{up_forward.4} parent=5 // pred_check_branch
      %846 = sbr.rel (%p844) target = $region56
    $region55: #{up_forward.4} parent=5 // pred_region
      %s847 = ssub.s32 %s14, 2
      // Predicated region
      $region57: #{up_forward.4} parent=55 // pred_check
        %p848 = pneg %p153
      $region58: #{up_forward.4} parent=55 // pred_check_branch
        %850 = sbr.rel (%p848) target = $region60
      $region59: #{up_forward.4} parent=55 // pred_region
        %p851 = scmp.lt.s32.totalorder %s20, 1
        %s852 = scalar_select %p851, %s20, 1
        %s853 = smul.addr %s852, 2
        %s854 = smul.addr %s853, 2
        %s855 = scalar_lea.vmem %s5, %s854
      $region60: #{up_forward.4} parent=55 // pred_fallthru
        _
      // Predicated region
      $region61: #{up_forward.4} parent=55 // pred_check
        %p856 = pneg %p179
      $region62: #{up_forward.4} parent=55 // pred_check_branch
        %858 = sbr.rel (%p856) target = $region64
      $region63: #{up_forward.4} parent=55 // pred_region
        %p859 = scmp.lt.s32.totalorder %s20, 1
        %s860 = scalar_select %p859, %s20, 1
        %s861 = smul.addr %s860, 4
        %s862 = scalar_lea.vmem %s6, %s861
      $region64: #{up_forward.4} parent=55 // pred_fallthru
        _
      // Predicated region
      $region65: #{up_forward.4} parent=55 // pred_check
        %p863 = pneg %p205
      $region66: #{up_forward.4} parent=55 // pred_check_branch
        %865 = sbr.rel (%p863) target = $region68
      $region67: #{up_forward.4} parent=55 // pred_region
        %p866 = scmp.lt.s32.totalorder %s20, 1
        %s867 = scalar_select %p866, %s20, 1
        %s868 = smul.addr %s867, 4
        %s869 = scalar_lea.vmem %s7, %s868
      $region68: #{up_forward.4} parent=55 // pred_fallthru
        _
    $region56: #{up_forward.4} parent=5 // pred_fallthru
      _
  $region6: #{up_forward.4} parent=0 // loop_footer
    %s18 = sadd.s32 1, %s14
  $region7: #{up_forward.4} parent=0 // loop_footer_branch
    %13 = sbr.rel target = $region3
  $region8: #{up_forward.4} parent=0 // loop_exit
    _

// kernel: up_forward.3
$region0: #{up_forward.3}
  #allocation0 [shape = 'u32[]', space=smem, size = 0x4, offset = 0x4, fixed_abs, tag = 'smem constant byte address 0x4 - core index']
  #allocation1 [shape = 'u32[144,128]{1,0:T(1,128)}', space=vmem, size = 0x12000, scoped, tag = 'internal scratch']
  #allocation2 [shape = 'bf16[8,290]{1,0:T(8,128)(2,1)}', space=vmem, size = 0x1800, scoped, tag = 'scratch operand']
  #allocation3 [shape = 'bf16[72,256]{1,0:T(8,128)(2,1)}', space=vmem, size = 0x9000, scoped, tag = 'scratch operand']
  %s0 = inlined_call_operand.vmem [shape: bf16[2,8,256], index: 0, kind: input, shape index: {}]
  %s1 = inlined_call_operand.vmem [shape: bf16[2,256], index: 1, kind: input, shape index: {}]
  %s2 = inlined_call_operand.vmem [shape: bf16[4,72], index: 2, kind: input, shape index: {}]
  %s3 = inlined_call_operand.vmem [shape: bf16[2,4,256], index: 3, kind: output, shape index: {0}]
  %s4 = inlined_call_operand.vmem [shape: f32[2,4,1], index: 4, kind: output, shape index: {1}]
  %s5 = inlined_call_operand.vmem [shape: f32[2,4,1], index: 5, kind: output, shape index: {2}]
  %6 = xla_tuple %s3, %s4, %s5
  %s7 = sld [smem:[#allocation0]]
  $region61: #{up_forward.3} parent=0
    _
  %s9 = ssub.s32 1, %s7
  %s10 = scalar_select 0, %s9, %s7
  loop: start=0, step=1, limit=4
  $region2: #{up_forward.3} parent=0 // loop_pre_header
    _
  $region3: #{up_forward.3} parent=0 // loop_header
    %s12 = sphi 0, %s16
    %p13 = scmp.ge.s32.totalorder %s12, 4
    %s22 = sphi 0, %s24
    %s25 = sphi 0, %s22
    %s26 = sphi 0, %s25
    %s42 = sphi 0, %s26
    %s46 = sphi 0, %s46
    %s48 = sphi 0, %s46
    %s49 = sphi 0, %s48
    %s63 = sphi 0, %s49
    %s67 = sphi 0, %s67
    %s69 = sphi 0, %s67
    %s70 = sphi 0, %s69
    %s84 = sphi 0, %s70
    %s90 = sphi 0, %s92
    %s93 = sphi 0, %s90
    %s94 = sphi 0, %s93
    %s110 = sphi 0, %s94
    %s116 = sphi 0, %s118
    %s119 = sphi 0, %s116
    %s120 = sphi 0, %s119
    %s136 = sphi 0, %s120
    %s142 = sphi 0, %s144
    %s145 = sphi 0, %s142
    %s146 = sphi 0, %s145
    %s162 = sphi 0, %s146
  $region4: #{up_forward.3} parent=0 // loop_header_branch
    %15 = sbr.rel (%p13) target = $region8
  $region5: #{up_forward.3} parent=0 // loop_body
    %s17 = ssub.s32 %s12, 1
    %s18 = ssub.s32 %s12, 2
    %s19 = sadd.s32 %s12, 1
    %s20 = ssub.s32 %s12, %s19
    %p21 = scmp.eq.s32.totalorder %s20, 0
    %s23 = sadd.s32 %s22, 1
    %s24 = scalar_select %p21, %s22, %s23
    %p27 = pneg %p21
    %p28 = scmp.eq.s32.totalorder %s12, 1
    %p29 = por %p27, %p28
    %p30 = scmp.ne.s32.totalorder %s22, %s25
    %p31 = scmp.eq.s32.totalorder %s12, 0
    %p32 = por %p30, %p31
    %p33 = scmp.ne.s32.totalorder %s22, %s25
    %p34 = scmp.eq.s32.totalorder %s17, 1
    %p35 = por %p33, %p34
    %p36 = scmp.ne.s32.totalorder %s25, %s26
    %p37 = scmp.eq.s32.totalorder %s17, 0
    %p38 = por %p36, %p37
    %p39 = scmp.ne.s32.totalorder %s25, %s26
    %p40 = scmp.eq.s32.totalorder %s18, 1
    %p41 = por %p39, %p40
    %p43 = scmp.ne.s32.totalorder %s26, %s42
    %p44 = scmp.eq.s32.totalorder %s18, 0
    %p45 = por %p43, %p44
    %s47 = sadd.s32 %s46, 1
    %p50 = scmp.eq.s32.totalorder %s12, 1
    %p51 = scmp.ne.s32.totalorder %s46, %s48
    %p52 = scmp.eq.s32.totalorder %s12, 0
    %p53 = por %p51, %p52
    %p54 = scmp.ne.s32.totalorder %s46, %s48
    %p55 = scmp.eq.s32.totalorder %s17, 1
    %p56 = por %p54, %p55
    %p57 = scmp.ne.s32.totalorder %s48, %s49
    %p58 = scmp.eq.s32.totalorder %s17, 0
    %p59 = por %p57, %p58
    %p60 = scmp.ne.s32.totalorder %s48, %s49
    %p61 = scmp.eq.s32.totalorder %s18, 1
    %p62 = por %p60, %p61
    %p64 = scmp.ne.s32.totalorder %s49, %s63
    %p65 = scmp.eq.s32.totalorder %s18, 0
    %p66 = por %p64, %p65
    %s68 = sadd.s32 %s67, 1
    %p71 = scmp.eq.s32.totalorder %s12, 1
    %p72 = scmp.ne.s32.totalorder %s67, %s69
    %p73 = scmp.eq.s32.totalorder %s12, 0
    %p74 = por %p72, %p73
    %p75 = scmp.ne.s32.totalorder %s67, %s69
    %p76 = scmp.eq.s32.totalorder %s17, 1
    %p77 = por %p75, %p76
    %p78 = scmp.ne.s32.totalorder %s69, %s70
    %p79 = scmp.eq.s32.totalorder %s17, 0
    %p80 = por %p78, %p79
    %p81 = scmp.ne.s32.totalorder %s69, %s70
    %p82 = scmp.eq.s32.totalorder %s18, 1
    %p83 = por %p81, %p82
    %p85 = scmp.ne.s32.totalorder %s70, %s84
    %p86 = scmp.eq.s32.totalorder %s18, 0
    %p87 = por %p85, %p86
    %s88 = ssub.s32 %s12, %s19
    %p89 = scmp.eq.s32.totalorder %s88, 0
    %s91 = sadd.s32 %s90, 1
    %s92 = scalar_select %p89, %s90, %s91
    %p95 = pneg %p89
    %p96 = scmp.eq.s32.totalorder %s12, 1
    %p97 = por %p95, %p96
    %p98 = scmp.ne.s32.totalorder %s90, %s93
    %p99 = scmp.eq.s32.totalorder %s12, 0
    %p100 = por %p98, %p99
    %p101 = scmp.ne.s32.totalorder %s90, %s93
    %p102 = scmp.eq.s32.totalorder %s17, 1
    %p103 = por %p101, %p102
    %p104 = scmp.ne.s32.totalorder %s93, %s94
    %p105 = scmp.eq.s32.totalorder %s17, 0
    %p106 = por %p104, %p105
    %p107 = scmp.ne.s32.totalorder %s93, %s94
    %p108 = scmp.eq.s32.totalorder %s18, 1
    %p109 = por %p107, %p108
    %p111 = scmp.ne.s32.totalorder %s94, %s110
    %p112 = scmp.eq.s32.totalorder %s18, 0
    %p113 = por %p111, %p112
    %s114 = ssub.s32 %s12, %s19
    %p115 = scmp.eq.s32.totalorder %s114, 0
    %s117 = sadd.s32 %s116, 1
    %s118 = scalar_select %p115, %s116, %s117
    %p121 = pneg %p115
    %p122 = scmp.eq.s32.totalorder %s12, 1
    %p123 = por %p121, %p122
    %p124 = scmp.ne.s32.totalorder %s116, %s119
    %p125 = scmp.eq.s32.totalorder %s12, 0
    %p126 = por %p124, %p125
    %p127 = scmp.ne.s32.totalorder %s116, %s119
    %p128 = scmp.eq.s32.totalorder %s17, 1
    %p129 = por %p127, %p128
    %p130 = scmp.ne.s32.totalorder %s119, %s120
    %p131 = scmp.eq.s32.totalorder %s17, 0
    %p132 = por %p130, %p131
    %p133 = scmp.ne.s32.totalorder %s119, %s120
    %p134 = scmp.eq.s32.totalorder %s18, 1
    %p135 = por %p133, %p134
    %p137 = scmp.ne.s32.totalorder %s120, %s136
    %p138 = scmp.eq.s32.totalorder %s18, 0
    %p139 = por %p137, %p138
    %s140 = ssub.s32 %s12, %s19
    %p141 = scmp.eq.s32.totalorder %s140, 0
    %s143 = sadd.s32 %s142, 1
    %s144 = scalar_select %p141, %s142, %s143
    %p147 = pneg %p141
    %p148 = scmp.eq.s32.totalorder %s12, 1
    %p149 = por %p147, %p148
    %p150 = scmp.ne.s32.totalorder %s142, %s145
    %p151 = scmp.eq.s32.totalorder %s12, 0
    %p152 = por %p150, %p151
    %p153 = scmp.ne.s32.totalorder %s142, %s145
    %p154 = scmp.eq.s32.totalorder %s17, 1
    %p155 = por %p153, %p154
    %p156 = scmp.ne.s32.totalorder %s145, %s146
    %p157 = scmp.eq.s32.totalorder %s17, 0
    %p158 = por %p156, %p157
    %p159 = scmp.ne.s32.totalorder %s145, %s146
    %p160 = scmp.eq.s32.totalorder %s18, 1
    %p161 = por %p159, %p160
    %p163 = scmp.ne.s32.totalorder %s146, %s162
    %p164 = scmp.eq.s32.totalorder %s18, 0
    %p165 = por %p163, %p164
    %p166 = scmp.le.s32.totalorder 1, %s12
    %p167 = scmp.lt.s32.totalorder %s12, 3
    %p168 = pnand %p166, %p167
    %p169 = pneg %p168
    // Predicated region
    $region9: #{up_forward.3} parent=5 // pred_check
      _
    $region10: #{up_forward.3} parent=5 // pred_check_branch
      %171 = sbr.rel (%p168) target = $region12
    $region11: #{up_forward.3} parent=5 // pred_region
      %s172 = ssub.s32 %s12, 1
      // Predicated region
      $region13: #{up_forward.3} parent=11 // pred_check
        %p173 = pneg %p59
      $region14: #{up_forward.3} parent=11 // pred_check_branch
        %175 = sbr.rel (%p173) target = $region16
      $region15: #{up_forward.3} parent=11 // pred_region
        _
      $region16: #{up_forward.3} parent=11 // pred_fallthru
        _
      // Predicated region
      $region17: #{up_forward.3} parent=11 // pred_check
        %p176 = pneg %p80
      $region18: #{up_forward.3} parent=11 // pred_check_branch
        %178 = sbr.rel (%p176) target = $region20
      $region19: #{up_forward.3} parent=11 // pred_region
        _
      $region20: #{up_forward.3} parent=11 // pred_fallthru
        _
    $region12: #{up_forward.3} parent=5 // pred_fallthru
      _
    %p179 = scmp.lt.s32.totalorder %s12, 2
    // Predicated region
    $region21: #{up_forward.3} parent=5 // pred_check
      %p180 = pneg %p179
    $region22: #{up_forward.3} parent=5 // pred_check_branch
      %182 = sbr.rel (%p180) target = $region24
    $region23: #{up_forward.3} parent=5 // pred_region
      // Predicated region
      $region25: #{up_forward.3} parent=23 // pred_check
        %p183 = pneg %p32
      $region26: #{up_forward.3} parent=23 // pred_check_branch
        %185 = sbr.rel (%p183) target = $region28
      $region27: #{up_forward.3} parent=23 // pred_region
        %p186 = scmp.lt.s32.totalorder %s12, 1
        %s187 = scalar_select %p186, %s12, 1
        %s188 = smul.addr %s187, 2
        %s189 = smul.addr %s188, 4
        %s190 = scalar_lea.vmem %s0, %s189
      $region28: #{up_forward.3} parent=23 // pred_fallthru
        _
    $region24: #{up_forward.3} parent=5 // pred_fallthru
      _
    %p191 = scmp.le.s32.totalorder 1, %s12
    %p192 = scmp.lt.s32.totalorder %s12, 3
    %p193 = pnand %p191, %p192
    %p194 = pneg %p193
    // Predicated region
    $region29: #{up_forward.3} parent=5 // pred_check
      _
    $region30: #{up_forward.3} parent=5 // pred_check_branch
      %196 = sbr.rel (%p193) target = $region32
    $region31: #{up_forward.3} parent=5 // pred_region
      %s197 = ssub.s32 %s12, 1
      %p198 = scmp.lt.s32.totalorder %s17, 1
      %s199 = scalar_select %p198, %s17, 1
      %s200 = smul.addr %s199, 2
      %s201 = smul.addr %s200, 4
      %s202 = scalar_lea.vmem %s0, %s201
      %p203 = pneg %p38
      %p204 = pneg %p35
      %p205 = pneg %p59
      %p206 = pneg %p56
      %p207 = pneg %p80
      %p208 = pneg %p77
      %p209 = pneg %p106
      %p210 = pneg %p103
      %p211 = scmp.lt.s32.totalorder %s17, 1
      %s212 = scalar_select %p211, %s17, 1
      %s213 = smul.addr %s212, 2
      %s214 = smul.addr %s213, 2
      %s215 = scalar_lea.vmem %s3, %s214
      %p216 = pneg %p132
      %p217 = pneg %p129
      %p218 = scmp.lt.s32.totalorder %s17, 1
      %s219 = scalar_select %p218, %s17, 1
      %s220 = smul.addr %s219, 4
      %s221 = scalar_lea.vmem %s4, %s220
      %p222 = pneg %p158
      %p223 = pneg %p155
      %p224 = scmp.lt.s32.totalorder %s17, 1
      %s225 = scalar_select %p224, %s17, 1
      %s226 = smul.addr %s225, 4
      %s227 = scalar_lea.vmem %s5, %s226
      %p228 = scmp.lt.s32.totalorder %s17, 1
      %s229 = scalar_select %p228, %s17, 1
      %s230 = smul.addr %s229, 2
      %s231 = smul.addr %s230, 4
      %s232 = scalar_lea.vmem %s0, %s231
      %p233 = scmp.lt.s32.totalorder %s17, 1
      %s234 = scalar_select %p233, %s17, 1
      %s235 = smul.addr %s234, 2
      %s236 = smul.addr %s235, 2
      %s237 = scalar_lea.vmem %s3, %s236
      %p238 = scmp.lt.s32.totalorder %s17, 1
      %s239 = scalar_select %p238, %s17, 1
      %s240 = smul.addr %s239, 4
      %s241 = scalar_lea.vmem %s4, %s240
      %p242 = scmp.lt.s32.totalorder %s17, 1
      %s243 = scalar_select %p242, %s17, 1
      %s244 = smul.addr %s243, 4
      %s245 = scalar_lea.vmem %s5, %s244
      %v247 = vld [vmem:[%s232] sm:$0xff]
      %vm248 = vcmask 134144
      %249 = vst.msk [vmem:[#allocation2] sm:$0xf] %vm248, 0
      %vm250 = vcmask 273544
      %251 = vst.msk [vmem:[#allocation2 + $0x8] sm:$0xf] %vm250, 0
      %253 = vrot.lane.b32.xlu0 %v247, 17
      %v254 = vpop.permute.xlu0 %253
      %v255 = vrot.slane %v254, 4
      %vm256 = vcmask 138240
      %v257 = vsel %vm256, %v255, %v254
      %vm260 = vcmask 1043592
      %vm261 = vcmask 1047556
      %vm262 = vmor %vm261, %vm260
      %263 = vst.msk [vmem:[#allocation2] sm:$0xff] %vm262, %v257
      %264 = vst.msk [vmem:[#allocation2 + $0x8] sm:$0xf] %vm248, %v255
      %v265 = vld [vmem:[%s1] sm:$0x3]
      %v266 = vld [vmem:[#allocation2] sm:$0xff]
      %v269 = vunpack.c.l.s4 1966171168
      %v270 = vunpack.c.0.s8 %v269
      %v271 = vlaneseq
      %v272 = vshrl.u32 %v271, 7
      %v273 = vsub.s32 %v270, %v272
      %v274 = vrot.slane %v265, %v273
      %v275 = vcombine.high %v274, %v274
      %v277 = vunpack.c.l.s4 1966171168
      %v278 = vunpack.c.0.s8 %v277
      %v279 = vlaneseq
      %v280 = vshrl.u32 %v279, 7
      %v281 = vsub.s32 %v278, %v280
      %v282 = vrot.slane %v274, %v281
      %v284 = vunpack.c.l.s4 1966171168
      %v285 = vunpack.c.0.s8 %v284
      %v286 = vlaneseq
      %v287 = vshrl.u32 %v286, 7
      %v288 = vsub.s32 %v285, %v287
      %v289 = vrot.slane %v275, %v288
      %v291 = vpack.i.b16 %v282, %v282
      %v293 = vlaneseq
      %v294 = vshrl.u32 %v293, 7
      %v295 = vsub.s32 0, %v294
      %v296 = vrot.slane %v291, %v295
      %v298 = vpack.i.b16 %v289, %v289
      %v300 = vlaneseq
      %v301 = vshrl.u32 %v300, 7
      %v302 = vsub.s32 0, %v301
      %v303 = vrot.slane %v298, %v302
      %v306 = vunpack.c.l.b16 %v296
      %v307 = vunpack.c.l.b16 %v303
      %v308 = vpack.c.b16 %v307, %v306
      %v310 = vmul.bf16 %v266, %v308
      %311 = vst [vmem:[#allocation3] sm:$0xff] %v310
      %v312 = vld [vmem:[#allocation2] sm:$0xff]
      %v313 = vld [vmem:[#allocation2 + $0x8] sm:$0xf]
      %316 = vrot.lane.b32.xlu0 %v312, 127
      %v317 = vpop.permute.xlu0 %316
      %318 = vrot.lane.b32.xlu0 %v313, 127
      %v319 = vpop.permute.xlu0 %318
      %v320 = vrot.slane %v317, 4
      %v321 = vrot.slane %v319, 4
      %vm322 = vcmask 1043456
      %v323 = vsel %vm322, %v320, %v321
      %vm324 = vcmask 1039360
      %v325 = vsel %vm324, %v317, %v323
      %327 = vst [vmem:[#allocation3 + $0x8] sm:$0xff] %v325
      %v328 = vld [vmem:[#allocation2] sm:$0xff]
      %v329 = vld [vmem:[#allocation2 + $0x8] sm:$0xf]
      %v330 = vshrl.u32 %v282, 16
      %v331 = vpack.i.b16 %v330, %v330
      %v333 = vlaneseq
      %v334 = vshrl.u32 %v333, 7
      %v335 = vsub.s32 0, %v334
      %v336 = vrot.slane %v331, %v335
      %v337 = vshrl.u32 %v289, 16
      %v338 = vpack.i.b16 %v337, %v337
      %v340 = vlaneseq
      %v341 = vshrl.u32 %v340, 7
      %v342 = vsub.s32 0, %v341
      %v343 = vrot.slane %v338, %v342
      %v346 = vunpack.c.l.b16 %v336
      %v347 = vunpack.c.l.b16 %v343
      %v348 = vpack.c.b16 %v347, %v346
      %349 = vrot.lane.b32.xlu0 %v348, 2
      %v350 = vpop.permute.xlu0 %349
      %v351 = vrot.slane %v350, 4
      %vm352 = vcmask 15360
      %v353 = vsel %vm352, %v351, %v350
      %v356 = vmul.bf16 %v328, %v353
      %v357 = vmul.bf16 %v329, %v351
      %360 = vrot.lane.b32.xlu0 %v356, 126
      %v361 = vpop.permute.xlu0 %360
      %362 = vrot.lane.b32.xlu0 %v357, 126
      %v363 = vpop.permute.xlu0 %362
      %v364 = vrot.slane %v361, 4
      %v365 = vrot.slane %v363, 4
      %v366 = vsel %vm322, %v364, %v365
      %vm367 = vcmask 1031168
      %v368 = vsel %vm367, %v361, %v366
      %370 = vst [vmem:[#allocation3 + $0x10] sm:$0xff] %v368
      %v371 = vld [vmem:[#allocation2] sm:$0xff]
      %v372 = vld [vmem:[#allocation2 + $0x8] sm:$0xf]
      %373 = vrot.lane.b32.xlu0 %v308, 16
      %v374 = vpop.permute.xlu0 %373
      %v375 = vrot.slane %v374, 4
      %vm376 = vcmask 130048
      %v377 = vsel %vm376, %v375, %v374
      %v380 = vmul.bf16 %v371, %v377
      %v381 = vmul.bf16 %v372, %v375
      %384 = vrot.lane.b32.xlu0 %v380, 112
      %v385 = vpop.permute.xlu0 %384
      %386 = vrot.lane.b32.xlu0 %v381, 112
      %v387 = vpop.permute.xlu0 %386
      %v388 = vrot.slane %v385, 4
      %v389 = vrot.slane %v387, 4
      %v390 = vsel %vm322, %v388, %v389
      %vm391 = vcmask 916480
      %v392 = vsel %vm391, %v385, %v390
      %394 = vst [vmem:[#allocation3 + $0x18] sm:$0xff] %v392
      %v395 = vld [vmem:[#allocation2] sm:$0xff]
      %v396 = vld [vmem:[#allocation2 + $0x8] sm:$0xf]
      %399 = vrot.lane.b32.xlu0 %v395, 111
      %v400 = vpop.permute.xlu0 %399
      %401 = vrot.lane.b32.xlu0 %v396, 111
      %v402 = vpop.permute.xlu0 %401
      %v403 = vrot.slane %v400, 4
      %v404 = vrot.slane %v402, 4
      %v405 = vsel %vm322, %v403, %v404
      %vm406 = vcmask 908288
      %v407 = vsel %vm406, %v400, %v405
      %409 = vst [vmem:[#allocation3 + $0x20] sm:$0xff] %v407
      %v410 = vld [vmem:[#allocation2] sm:$0xff]
      %v411 = vld [vmem:[#allocation2 + $0x8] sm:$0xf]
      %412 = vrot.lane.b32.xlu0 %v348, 18
      %v413 = vpop.permute.xlu0 %412
      %v414 = vrot.slane %v413, 4
      %vm415 = vcmask 146432
      %v416 = vsel %vm415, %v414, %v413
      %v419 = vmul.bf16 %v410, %v416
      %v420 = vmul.bf16 %v411, %v414
      %423 = vrot.lane.b32.xlu0 %v419, 110
      %v424 = vpop.permute.xlu0 %423
      %425 = vrot.lane.b32.xlu0 %v420, 110
      %v426 = vpop.permute.xlu0 %425
      %v427 = vrot.slane %v424, 4
      %v428 = vrot.slane %v426, 4
      %v429 = vsel %vm322, %v427, %v428
      %vm430 = vcmask 900096
      %v431 = vsel %vm430, %v424, %v429
      %433 = vst [vmem:[#allocation3 + $0x28] sm:$0xff] %v431
      %v434 = vld [vmem:[#allocation2] sm:$0xff]
      %v435 = vld [vmem:[#allocation2 + $0x8] sm:$0xf]
      %436 = vrot.lane.b32.xlu0 %v308, 32
      %v437 = vpop.permute.xlu0 %436
      %v438 = vrot.slane %v437, 4
      %vm439 = vcmask 261120
      %v440 = vsel %vm439, %v438, %v437
      %v443 = vmul.bf16 %v434, %v440
      %v444 = vmul.bf16 %v435, %v438
      %447 = vrot.lane.b32.xlu0 %v443, 96
      %v448 = vpop.permute.xlu0 %447
      %449 = vrot.lane.b32.xlu0 %v444, 96
      %v450 = vpop.permute.xlu0 %449
      %v451 = vrot.slane %v448, 4
      %v452 = vrot.slane %v450, 4
      %v453 = vsel %vm322, %v451, %v452
      %vm454 = vcmask 785408
      %v455 = vsel %vm454, %v448, %v453
      %457 = vst [vmem:[#allocation3 + $0x30] sm:$0xff] %v455
      %v458 = vld [vmem:[#allocation2] sm:$0xff]
      %v459 = vld [vmem:[#allocation2 + $0x8] sm:$0xf]
      %462 = vrot.lane.b32.xlu0 %v458, 95
      %v463 = vpop.permute.xlu0 %462
      %464 = vrot.lane.b32.xlu0 %v459, 95
      %v465 = vpop.permute.xlu0 %464
      %v466 = vrot.slane %v463, 4
      %v467 = vrot.slane %v465, 4
      %v468 = vsel %vm322, %v466, %v467
      %vm469 = vcmask 777216
      %v470 = vsel %vm469, %v463, %v468
      %472 = vst [vmem:[#allocation3 + $0x38] sm:$0xff] %v470
      %v473 = vld [vmem:[#allocation2] sm:$0xff]
      %v474 = vld [vmem:[#allocation2 + $0x8] sm:$0xf]
      %475 = vrot.lane.b32.xlu0 %v348, 34
      %v476 = vpop.permute.xlu0 %475
      %v477 = vrot.slane %v476, 4
      %vm478 = vcmask 277504
      %v479 = vsel %vm478, %v477, %v476
      %v482 = vmul.bf16 %v473, %v479
      %v483 = vmul.bf16 %v474, %v477
      %486 = vrot.lane.b32.xlu0 %v482, 94
      %v487 = vpop.permute.xlu0 %486
      %488 = vrot.lane.b32.xlu0 %v483, 94
      %v489 = vpop.permute.xlu0 %488
      %v490 = vrot.slane %v487, 4
      %v491 = vrot.slane %v489, 4
      %v492 = vsel %vm322, %v490, %v491
      %vm493 = vcmask 769024
      %v494 = vsel %vm493, %v487, %v492
      %496 = vst [vmem:[#allocation3 + $0x40] sm:$0xff] %v494
      %v497 = vld [vmem:[%s2] sm:$0x3]
      %v498 = vld [vmem:[#allocation3] sm:$0xff]
      %v499 = vld [vmem:[#allocation3 + $0x8] sm:$0xff]
      %v500 = vld [vmem:[#allocation3 + $0x10] sm:$0xff]
      %v501 = vld [vmem:[#allocation3 + $0x18] sm:$0xff]
      %v502 = vld [vmem:[#allocation3 + $0x20] sm:$0xff]
      %v503 = vld [vmem:[#allocation3 + $0x28] sm:$0xff]
      %v504 = vld [vmem:[#allocation3 + $0x30] sm:$0xff]
      %v505 = vld [vmem:[#allocation3 + $0x38] sm:$0xff]
      %v506 = vld [vmem:[#allocation3 + $0x40] sm:$0xff]
      %v516 = vunpack.c.l.b16 %v498
      %v517 = vunpack.c.h.b16 %v498
      %v518 = vunpack.c.l.b16 %v499
      %v519 = vunpack.c.h.b16 %v499
      %v520 = vunpack.c.l.b16 %v500
      %v521 = vunpack.c.h.b16 %v500
      %v522 = vunpack.c.l.b16 %v501
      %v523 = vunpack.c.h.b16 %v501
      %v524 = vunpack.c.l.b16 %v502
      %v525 = vunpack.c.h.b16 %v502
      %v526 = vunpack.c.l.b16 %v503
      %v527 = vunpack.c.h.b16 %v503
      %v528 = vunpack.c.l.b16 %v504
      %v529 = vunpack.c.h.b16 %v504
      %v530 = vunpack.c.l.b16 %v505
      %v531 = vunpack.c.h.b16 %v505
      %v532 = vunpack.c.l.b16 %v506
      %v533 = vunpack.c.h.b16 %v506
      %v534 = vpack.c.b16 %v518, %v516
      %v535 = vpack.c.b16 %v519, %v517
      %v536 = vpack.c.b16 %v522, %v520
      %v537 = vpack.c.b16 %v523, %v521
      %v538 = vpack.c.b16 %v526, %v524
      %v539 = vpack.c.b16 %v527, %v525
      %v540 = vpack.c.b16 %v530, %v528
      %v541 = vpack.c.b16 %v531, %v529
      %v542 = vpack.c.b16 %v532, %v532
      %v543 = vpack.c.b16 %v533, %v533
      %vm552 = vcmask 588800
      %v554 = vsel %vm552, %v497, 0
      %vm556 = vcmask 1043456
      %v558 = vsel %vm556, %v542, 0
      %v561 = vsel %vm556, %v543, 0
      %563 = vmatprep.subr.bf16.mxu0 0
      %564 = vmatpush1.bf16.msra.mxu0 0
      %565 = vmatprep.subr.bf16.mxu0 0
      %566 = vmatpush1.bf16.msra.mxu0 0
      %567 = vmatprep.subr.bf16.mxu0 0
      %568 = vmatpush1.bf16.msra.mxu0 0
      %569 = vmatprep.subr.bf16.mxu0 %v561
      %570 = vmatpush1.bf16.msra.mxu0 %v558
      %571 = vmatprep.subr.bf16.mxu0 %v541
      %572 = vmatpush1.bf16.msra.mxu0 %v540
      %573 = vmatprep.subr.bf16.mxu0 %v539
      %574 = vmatpush1.bf16.msra.mxu0 %v538
      %575 = vmatprep.subr.bf16.mxu0 %v537
      %576 = vmatpush1.bf16.msra.mxu0 %v536
      %577 = vmatprep.subr.bf16.mxu0 %v535
      %578 = vmatpush1.bf16.msra.mxu0 %v534
      %579 = vmatprep.subr.bf16.mxu0 0
      %580 = vmatpush2.bf16.msra.mxu0 0
      %581 = vmatprep.subr.bf16.mxu0 0
      %582 = vmatpush2.bf16.msra.mxu0 0
      %583 = vmatprep.subr.bf16.mxu0 0
      %584 = vmatpush2.bf16.msra.mxu0 0
      %585 = vmatprep.subr.bf16.mxu0 0
      %586 = vmatpush2.bf16.msra.mxu0 0
      %587 = vmatprep.subr.bf16.mxu0 0
      %588 = vmatpush2.bf16.msra.mxu0 0
      %589 = vmatprep.subr.bf16.mxu0 0
      %590 = vmatpush2.bf16.msra.mxu0 0
      %591 = vmatprep.subr.bf16.mxu0 0
      %592 = vmatpush2.bf16.msra.mxu0 0
      %593 = vmatprep.subr.bf16.mxu0 0
      %594 = vmatpush2.bf16.msra.mxu0 0
      %595 = vmatprep.mubr.bf16.mxu0 0
      %596 = vmatmul.mubr.bf16.gmra.mxu0 %v554
      %v597 = vpop.f32.mrf.mxu0
      %v598 = vadd.f32 0.0, %v597
      %v599 = vpop.f32.mrf.mxu0
      %v600 = vadd.f32 0.0, %v599
      %v601 = vpop.f32.mrf.mxu0
      %v602 = vpop.f32.mrf.mxu0
      %603 = vdwg.mxu0
      %v604 = vsel %vm556, %v598, 0.0
      %v605 = vsel %vm556, %v600, 0.0
      %v606 = vadd.f32 %v604, %v605
      %607 = vadd.xlane.f32.xlu0 %v606
      %v608 = vpop.xlane.xlu0 %607
      %vm609 = vcmask 3072
      %610 = vst.msk [vmem:[%s241] sm:$0xf] %vm609, %v608
      %v611 = vmul.f32 %v598, %v598
      %v612 = vmul.f32 %v600, %v600
      %v613 = vsel %vm556, %v611, 0.0
      %v614 = vsel %vm556, %v612, 0.0
      %v615 = vadd.f32 %v613, %v614
      %616 = vadd.xlane.f32.xlu0 %v615
      %v617 = vpop.xlane.xlu0 %616
      %618 = vst.msk [vmem:[%s245] sm:$0xf] %vm609, %v617
      %v619 = vpack.c.bf16 %v598, %v598
      %v620 = vpack.c.bf16 %v600, %v600
      %v623 = vcombine.low %v619, %v620
      %v625 = vunpack.c.l.s4 1983009808
      %v626 = vunpack.c.0.s8 %v625
      %v627 = vlaneseq
      %v628 = vshrl.u32 %v627, 7
      %v629 = vsub.s32 %v626, %v628
      %v630 = vrot.slane %v623, %v629
      %632 = vst [vmem:[%s237] sm:$0xf] %v630
      %p633 = scmp.lt.s32.totalorder %s17, 1
      %s634 = scalar_select %p633, %s17, 1
      %s635 = smul.addr %s634, 2
      %s636 = smul.addr %s635, 2
      %s637 = scalar_lea.vmem %s3, %s636
      %p638 = scmp.lt.s32.totalorder %s17, 1
      %s639 = scalar_select %p638, %s17, 1
      %s640 = smul.addr %s639, 4
      %s641 = scalar_lea.vmem %s4, %s640
      %p642 = scmp.lt.s32.totalorder %s17, 1
      %s643 = scalar_select %p642, %s17, 1
      %s644 = smul.addr %s643, 4
      %s645 = scalar_lea.vmem %s5, %s644
      // Predicated region
      $region33: #{up_forward.3} parent=31 // pred_check
        %p646 = pneg %p103
      $region34: #{up_forward.3} parent=31 // pred_check_branch
        %648 = sbr.rel (%p646) target = $region36
      $region35: #{up_forward.3} parent=31 // pred_region
        _
      $region36: #{up_forward.3} parent=31 // pred_fallthru
        _
      // Predicated region
      $region37: #{up_forward.3} parent=31 // pred_check
        %p649 = pneg %p129
      $region38: #{up_forward.3} parent=31 // pred_check_branch
        %651 = sbr.rel (%p649) target = $region40
      $region39: #{up_forward.3} parent=31 // pred_region
        _
      $region40: #{up_forward.3} parent=31 // pred_fallthru
        _
      // Predicated region
      $region41: #{up_forward.3} parent=31 // pred_check
        %p652 = pneg %p155
      $region42: #{up_forward.3} parent=31 // pred_check_branch
        %654 = sbr.rel (%p652) target = $region44
      $region43: #{up_forward.3} parent=31 // pred_region
        _
      $region44: #{up_forward.3} parent=31 // pred_fallthru
        _
    $region32: #{up_forward.3} parent=5 // pred_fallthru
      _
    %p655 = scmp.le.s32.totalorder 2, %s12
    // Predicated region
    $region45: #{up_forward.3} parent=5 // pred_check
      %p656 = pneg %p655
    $region46: #{up_forward.3} parent=5 // pred_check_branch
      %658 = sbr.rel (%p656) target = $region48
    $region47: #{up_forward.3} parent=5 // pred_region
      %s659 = ssub.s32 %s12, 2
      // Predicated region
      $region49: #{up_forward.3} parent=47 // pred_check
        %p660 = pneg %p109
      $region50: #{up_forward.3} parent=47 // pred_check_branch
        %662 = sbr.rel (%p660) target = $region52
      $region51: #{up_forward.3} parent=47 // pred_region
        %p663 = scmp.lt.s32.totalorder %s18, 1
        %s664 = scalar_select %p663, %s18, 1
        %s665 = smul.addr %s664, 2
        %s666 = smul.addr %s665, 2
        %s667 = scalar_lea.vmem %s3, %s666
      $region52: #{up_forward.3} parent=47 // pred_fallthru
        _
      // Predicated region
      $region53: #{up_forward.3} parent=47 // pred_check
        %p668 = pneg %p135
      $region54: #{up_forward.3} parent=47 // pred_check_branch
        %670 = sbr.rel (%p668) target = $region56
      $region55: #{up_forward.3} parent=47 // pred_region
        %p671 = scmp.lt.s32.totalorder %s18, 1
        %s672 = scalar_select %p671, %s18, 1
        %s673 = smul.addr %s672, 4
        %s674 = scalar_lea.vmem %s4, %s673
      $region56: #{up_forward.3} parent=47 // pred_fallthru
        _
      // Predicated region
      $region57: #{up_forward.3} parent=47 // pred_check
        %p675 = pneg %p161
      $region58: #{up_forward.3} parent=47 // pred_check_branch
        %677 = sbr.rel (%p675) target = $region60
      $region59: #{up_forward.3} parent=47 // pred_region
        %p678 = scmp.lt.s32.totalorder %s18, 1
        %s679 = scalar_select %p678, %s18, 1
        %s680 = smul.addr %s679, 4
        %s681 = scalar_lea.vmem %s5, %s680
      $region60: #{up_forward.3} parent=47 // pred_fallthru
        _
    $region48: #{up_forward.3} parent=5 // pred_fallthru
      _
  $region6: #{up_forward.3} parent=0 // loop_footer
    %s16 = sadd.s32 1, %s12
  $region7: #{up_forward.3} parent=0 // loop_footer_branch
    %11 = sbr.rel target = $region3
  $region8: #{up_forward.3} parent=0 // loop_exit
    _

</llo_original>
